<compile_context>
chip_gen: v7x
topology: tpu7x:2x2x1
jax: 0.10.0
libtpu: 0.0.40
codegen_flags: <defaults>
</compile_context>

<pallas_src>
import jax
import jax.numpy as jnp
from jax import lax
from jax.experimental import pallas as pl
from jax.experimental.pallas import tpu as pltpu


_VMEM_LIMIT = 48 * 1024 * 1024  # fits v7x (64 MiB phys) with headroom; > defaults


def _make_divisible(ch, divisor=8, min_ch=None):
    if min_ch is None:
        min_ch = divisor
    new_ch = max(min_ch, int(ch + divisor / 2) // divisor * divisor)
    if new_ch < 0.9 * ch:
        new_ch += divisor
    return new_ch


def _pick_cout_tile(cout):
    for t in (512, 256, 128):
        if cout % t == 0:
            return t
    return cout  # small / odd channel counts: single full-width tile


def _pick_hw_tile(total, target=1024):
    cand = min(total, target)
    while cand > 0:
        if total % cand == 0 and cand % 8 == 0:
            return cand
        cand -= 1
    return total


# ----------------------------------------------------------------------------
# Kernel A: ConvTranspose(k=4,s=2,p=1) via parity decomposition (4 taps/parity)
#           + per-sample BatchNorm statistics (sum / sum-of-squares).
# Grid: (batch, Cout-tiles, parity).  Inputs are bf16, accumulation is f32.
# ----------------------------------------------------------------------------
def _convt_parity_kernel(x_ref, w_ref, y_ref, sum_ref, ssq_ref):
    # x_ref: (H+1, W+1, Cin) bf16   (parity-shifted, halo-padded view)
    # w_ref: (4, Cin, tcout)  bf16  (taps ordered dy*2+dx for this parity)
    # y_ref: (H*W, tcout)     f32
    hp1, wp1, cin = x_ref.shape
    h, w = hp1 - 1, wp1 - 1
    tcout = y_ref.shape[-1]

    acc = jnp.zeros((h * w, tcout), jnp.float32)
    for dy in range(2):
        for dx in range(2):
            xs = x_ref[pl.ds(dy, h), pl.ds(dx, w), :].reshape(h * w, cin)
            acc = acc + jnp.dot(xs, w_ref[2 * dy + dx],
                                preferred_element_type=jnp.float32)
    y_ref[...] = acc

    @pl.when(pl.program_id(2) == 0)           # first parity of this (n, j)
    def _():
        sum_ref[...] = jnp.zeros_like(sum_ref)
        ssq_ref[...] = jnp.zeros_like(ssq_ref)

    # TODO(synk): if a bundle dump shows these cross-sublane reductions as the
    # binding slot, move them onto the (under-used) MXU via a ones-row matmul.
    sum_ref[...] += jnp.sum(acc, axis=0, keepdims=True)
    ssq_ref[...] += jnp.sum(acc * acc, axis=0, keepdims=True)


def convt_parity_gemm(xpar, wk, n, h, w):
    # xpar: (4*N, H+1, W+1, Cin) bf16, parity-major.  wk: (16, Cin, Cout) bf16.
    hp1, wp1, cin = xpar.shape[1:]
    cout = wk.shape[-1]
    hw = h * w
    tcout = _pick_cout_tile(cout)
    nj = cout // tcout

    return pl.pallas_call(
        _convt_parity_kernel,
        out_shape=(
            jax.ShapeDtypeStruct((n, 4, hw, cout), jnp.float32),   # y (parity layout)
            jax.ShapeDtypeStruct((n, 1, cout), jnp.float32),       # per-sample sum
            jax.ShapeDtypeStruct((n, 1, cout), jnp.float32),       # per-sample sumsq
        ),
        grid_spec=pltpu.PrefetchScalarGridSpec(
            num_scalar_prefetch=0,
            grid=(n, nj, 4),
            in_specs=[
                pl.BlockSpec((None, hp1, wp1, cin),
                             lambda ni, j, p: (p * n + ni, 0, 0, 0)),
                pl.BlockSpec((4, cin, tcout),
                             lambda ni, j, p: (p, 0, j)),
            ],
            out_specs=(
                pl.BlockSpec((None, None, hw, tcout),
                             lambda ni, j, p: (ni, p, 0, j)),
                pl.BlockSpec((None, 1, tcout), lambda ni, j, p: (ni, 0, j)),
                pl.BlockSpec((None, 1, tcout), lambda ni, j, p: (ni, 0, j)),
            ),
        ),
        compiler_params=pltpu.CompilerParams(
            dimension_semantics=("parallel", "parallel", "arbitrary"),
            vmem_limit_bytes=_VMEM_LIMIT),
    )(xpar, wk)


# ----------------------------------------------------------------------------
# Kernel B1: SE pooling pass — accumulate per-sample channel sums of
#            relu(BN(y)) across HW tiles.
# ----------------------------------------------------------------------------
def _se_pool_kernel(y_ref, bns_ref, bnb_ref, psum_ref):
    h = jnp.maximum(y_ref[...] * bns_ref[...] + bnb_ref[...], 0.0)

    @pl.when(pl.program_id(1) == 0)
    def _():
        psum_ref[...] = jnp.zeros_like(psum_ref)

    psum_ref[...] += jnp.sum(h, axis=0, keepdims=True)


def se_pool(y3, bn_scale, bn_shift, thw):
    n, ohw, cout = y3.shape
    t = ohw // thw
    return pl.pallas_call(
        _se_pool_kernel,
        out_shape=jax.ShapeDtypeStruct((n, 1, cout), jnp.float32),
        grid_spec=pltpu.PrefetchScalarGridSpec(
            num_scalar_prefetch=0,
            grid=(n, t),
            in_specs=[
                pl.BlockSpec((None, thw, cout), lambda ni, ti: (ni, ti, 0)),
                pl.BlockSpec((1, cout), lambda ni, ti: (0, 0)),
                pl.BlockSpec((1, cout), lambda ni, ti: (0, 0)),
            ],
            out_specs=pl.BlockSpec((None, 1, cout), lambda ni, ti: (ni, 0, 0)),
        ),
        compiler_params=pltpu.CompilerParams(
            dimension_semantics=("parallel", "arbitrary"),
            vmem_limit_bytes=_VMEM_LIMIT),
    )(y3, bn_scale, bn_shift)


# ----------------------------------------------------------------------------
# Kernel B2: apply pass — recompute BN+ReLU (cheap) and rescale by the SE gate
#            (fc1 -> relu -> fc2 -> hardsigmoid), computed once per sample
#            into a persistent VMEM scratch.
# ----------------------------------------------------------------------------
def _bn_relu_se_apply_kernel(y_ref, bns_ref, bnb_ref, pm_ref,
                             w1_ref, b1_ref, w2_ref, b2_ref, o_ref, scale_sc):
    @pl.when(pl.program_id(1) == 0)
    def _():
        s = jnp.dot(pm_ref[...], w1_ref[...],
                    preferred_element_type=jnp.float32) + b1_ref[...]
        s = jnp.maximum(s, 0.0)                                    # fc1 + ReLU
        s = jnp.dot(s, w2_ref[...],
                    preferred_element_type=jnp.float32) + b2_ref[...]
        scale_sc[...] = jnp.clip(s * (1.0 / 6.0) + 0.5, 0.0, 1.0)  # hardsigmoid

    h = jnp.maximum(y_ref[...] * bns_ref[...] + bnb_ref[...], 0.0)  # BN + ReLU
    o_ref[...] = h * scale_sc[...]


def bn_relu_se_apply(y3, bn_scale, bn_shift, pooled_mean, w1t, b1, w2t, b2, thw):
    n, ohw, cout = y3.shape
    cq = w1t.shape[1]
    t = ohw // thw
    return pl.pallas_call(
        _bn_relu_se_apply_kernel,
        out_shape=jax.ShapeDtypeStruct((n, ohw, cout), jnp.float32),
        grid_spec=pltpu.PrefetchScalarGridSpec(
            num_scalar_prefetch=0,
            grid=(n, t),
            in_specs=[
                pl.BlockSpec((None, thw, cout), lambda ni, ti: (ni, ti, 0)),
                pl.BlockSpec((1, cout), lambda ni, ti: (0, 0)),
                pl.BlockSpec((1, cout), lambda ni, ti: (0, 0)),
                pl.BlockSpec((None, 1, cout), lambda ni, ti: (ni, 0, 0)),
                pl.BlockSpec((cout, cq), lambda ni, ti: (0, 0)),
                pl.BlockSpec((1, cq), lambda ni, ti: (0, 0)),
                pl.BlockSpec((cq, cout), lambda ni, ti: (0, 0)),
                pl.BlockSpec((1, cout), lambda ni, ti: (0, 0)),
            ],
            out_specs=pl.BlockSpec((None, thw, cout), lambda ni, ti: (ni, ti, 0)),
            scratch_shapes=[pltpu.VMEM((1, cout), jnp.float32)],
        ),
        compiler_params=pltpu.CompilerParams(
            dimension_semantics=("parallel", "arbitrary"),
            vmem_limit_bytes=_VMEM_LIMIT),
    )(y3, bn_scale, bn_shift, pooled_mean, w1t, b1, w2t, b2)


# ----------------------------------------------------------------------------
# Wrapper: layout plumbing (NCHW <-> channels-last), parity weight prep,
#          BN fold, parity de-interleave, final concat with skip.
# ----------------------------------------------------------------------------
def unet_up_forward(x, skip, params, eps=1e-5):
    # x: (N, Cin, H, W); skip: (N, Cout, 2H, 2W)  ->  out: (N, 2*Cout, 2H, 2W)
    wct = params["wct"]                       # (Cin, Cout, 4, 4) ConvTranspose weight
    gamma, beta = params["gamma"], params["beta"]
    w1, b1, w2, b2 = params["w1"], params["b1"], params["w2"], params["b2"]

    N, Cin, H, W = x.shape
    Cout = wct.shape[1]
    OH, OW = 2 * H, 2 * W
    HW = H * W
    OHW = 4 * HW

    # --- parity-shifted, halo-padded views of x (channels-last, bf16) --------
    xcl = jnp.transpose(x, (0, 2, 3, 1))                       # (N, H, W, Cin)
    xpad = jnp.pad(xcl, ((0, 0), (1, 1), (1, 1), (0, 0)))      # 1-px halo
    xpar = jnp.stack(
        [xpad[:, py:py + H + 1, px:px + W + 1, :]
         for py in range(2) for px in range(2)], axis=0)       # (4, N, H+1, W+1, Cin)
    xpar = xpar.reshape(4 * N, H + 1, W + 1, Cin).astype(jnp.bfloat16)

    # --- per-parity 2x2 taps:  wk[p, dy*2+dx, ci, co] = wf[ci, co, 2dy+py, 2dx+px]
    wf = wct[:, :, ::-1, ::-1]                                 # spatially flipped
    wf_t = jnp.transpose(wf, (2, 3, 0, 1))                     # (ky, kx, Cin, Cout)
    wk = (wf_t.reshape(2, 2, 2, 2, Cin, Cout)                  # (dy, py, dx, px, ..)
              .transpose(1, 3, 0, 2, 4, 5)                     # (py, px, dy, dx, ..)
              .reshape(16, Cin, Cout)).astype(jnp.bfloat16)

    # --- Kernel A: parity GEMMs + per-sample BN statistics -------------------
    y_par, psum_a, pssq_a = convt_parity_gemm(xpar, wk, N, H, W)

    # --- fold BN (training-mode batch stats) into per-channel scale/shift ----
    cnt = float(N * OHW)
    mean = jnp.sum(psum_a, axis=0) / cnt                       # (1, Cout)
    var = jnp.sum(pssq_a, axis=0) / cnt - mean * mean
    inv_std = lax.rsqrt(var + eps)
    bn_scale = gamma.reshape(1, -1) * inv_std
    bn_shift = beta.reshape(1, -1) - mean * bn_scale

    # --- Kernels B1/B2: two-pass BN+ReLU+SE over HW tiles ---------------------
    y3 = y_par.reshape(N, OHW, Cout)                           # parity-major rows
    thw = _pick_hw_tile(OHW)
    pooled_mean = se_pool(y3, bn_scale, bn_shift, thw) / float(OHW)
    scaled = bn_relu_se_apply(
        y3, bn_scale, bn_shift, pooled_mean,
        w1.T, b1.reshape(1, -1), w2.T, b2.reshape(1, -1), thw)  # (N, OHW, Cout)

    # --- parity de-interleave + NHWC->NCHW in a single transpose -------------
    out_nchw = (scaled.reshape(N, 2, 2, H, W, Cout)
                      .transpose(0, 5, 3, 1, 4, 2)
                      .reshape(N, Cout, OH, OW))
    # skip is concatenated directly (never routed through a kernel)
    return jnp.concatenate([out_nchw, skip], axis=1)


# ----------------------------------------------------------------------------
# Pure-JAX reference (same semantics, f32) for the correctness check.
# ----------------------------------------------------------------------------
def reference_forward(x, skip, params, eps=1e-5):
    wct, gamma, beta = params["wct"], params["gamma"], params["beta"]
    w1, b1, w2, b2 = params["w1"], params["b1"], params["w2"], params["b2"]
    rhs = jnp.transpose(wct, (1, 0, 2, 3))[:, :, ::-1, ::-1]
    y = lax.conv_general_dilated(
        x, rhs, window_strides=(1, 1), padding=((2, 2), (2, 2)),
        lhs_dilation=(2, 2), dimension_numbers=("NCHW", "OIHW", "NCHW"))
    mean = jnp.mean(y, axis=(0, 2, 3), keepdims=True)
    var = jnp.mean((y - mean) ** 2, axis=(0, 2, 3), keepdims=True)
    h = (y - mean) * lax.rsqrt(var + eps)
    h = h * gamma.reshape(1, -1, 1, 1) + beta.reshape(1, -1, 1, 1)
    h = jnp.maximum(h, 0.0)
    pooled = jnp.mean(h, axis=(2, 3))                      # (N, Cout)
    s = jnp.maximum(pooled @ w1.T + b1, 0.0)               # fc1 + relu
    s = s @ w2.T + b2                                      # fc2
    s = jnp.clip(s / 6.0 + 0.5, 0.0, 1.0)                  # hardsigmoid
    scaled = h * s[:, :, None, None]
    return jnp.concatenate([scaled, skip], axis=1)


if __name__ == "__main__":
    N, Cin, H, W = 2, 16, 8, 8
    Cout = 32
    OH, OW = 2 * H, 2 * W
    Cq = _make_divisible(Cout // 4, 8)

    key = jax.random.PRNGKey(0)
    ks = jax.random.split(key, 9)
    params = {
        "wct": 0.05 * jax.random.normal(ks[0], (Cin, Cout, 4, 4), jnp.float32),
        "gamma": 1.0 + 0.1 * jax.random.normal(ks[1], (Cout,), jnp.float32),
        "beta": 0.1 * jax.random.normal(ks[2], (Cout,), jnp.float32),
        "w1": 0.2 * jax.random.normal(ks[3], (Cq, Cout), jnp.float32),
        "b1": 0.05 * jax.random.normal(ks[4], (Cq,), jnp.float32),
        "w2": 0.2 * jax.random.normal(ks[5], (Cout, Cq), jnp.float32),
        "b2": 0.05 * jax.random.normal(ks[6], (Cout,), jnp.float32),
    }
    x = jax.random.normal(ks[7], (N, Cin, H, W), jnp.float32)
    skip = jax.random.normal(ks[8], (N, Cout, OH, OW), jnp.float32)

    out = jax.block_until_ready(jax.jit(unet_up_forward)(x, skip, params))
    assert out.shape == (N, 2 * Cout, OH, OW), out.shape

    # Tolerance accounts for bf16 MXU operands in the Pallas path vs f32 ref.
    ref = reference_forward(x, skip, params)
    if not bool(jnp.allclose(out, ref, atol=3e-2, rtol=3e-2)):
        raise SystemExit(
            f"MISMATCH: max abs err = {float(jnp.max(jnp.abs(out - ref)))}")
    print("KERNEL_OK")
</pallas_src>

<mosaic_0001>
module attributes {stable_mosaic.version = 11 : i64} {
  func.func @_convt_parity_kernel(%arg0: i32, %arg1: i32, %arg2: i32, %arg3: memref<1x9x9x16xbf16, #tpu.memory_space<vmem>>, %arg4: memref<4x16x32xbf16, #tpu.memory_space<vmem>>, %arg5: memref<1x1x64x32xf32, #tpu.memory_space<vmem>>, %arg6: memref<1x1x32xf32, #tpu.memory_space<vmem>>, %arg7: memref<1x1x32xf32, #tpu.memory_space<vmem>>) attributes {dimension_semantics = [#tpu.dimension_semantics<parallel>, #tpu.dimension_semantics<parallel>, #tpu.dimension_semantics<arbitrary>], iteration_bounds = array<i64: 2, 1, 4>, scalar_prefetch = 0 : i64, scratch_operands = 0 : i64, tpu.core_type = #tpu.core_type<tc>, window_params = [{transform_indices = @transform_0, window_bounds = array<i64: 1, 9, 9, 16>}, {transform_indices = @transform_1, window_bounds = array<i64: 4, 16, 32>}, {transform_indices = @transform_2, window_bounds = array<i64: 1, 1, 64, 32>}, {transform_indices = @transform_3, window_bounds = array<i64: 1, 1, 32>}, {transform_indices = @transform_4, window_bounds = array<i64: 1, 1, 32>}]} {
    %cst = arith.constant 0.000000e+00 : f32
    %0 = vector.broadcast %cst : f32 to vector<64x32xf32>
    %c0 = arith.constant 0 : index
    %c0_0 = arith.constant 0 : index
    %c0_1 = arith.constant 0 : index
    %c0_2 = arith.constant 0 : index
    %1 = vector.load %arg3[%c0, %c0_0, %c0_1, %c0_2] : memref<1x9x9x16xbf16, #tpu.memory_space<vmem>>, vector<1x8x8x16xbf16>
    %2 = vector.shape_cast %1 : vector<1x8x8x16xbf16> to vector<8x8x16xbf16>
    %3 = vector.shape_cast %2 : vector<8x8x16xbf16> to vector<64x16xbf16>
    %c0_3 = arith.constant 0 : index
    %c0_4 = arith.constant 0 : index
    %c0_5 = arith.constant 0 : index
    %4 = vector.load %arg4[%c0_3, %c0_4, %c0_5] : memref<4x16x32xbf16, #tpu.memory_space<vmem>>, vector<1x16x32xbf16>
    %5 = vector.shape_cast %4 : vector<1x16x32xbf16> to vector<16x32xbf16>
    %cst_6 = arith.constant dense<0.000000e+00> : vector<64x32xf32>
    %6 = tpu.matmul %3, %5, %cst_6 {dimension_numbers = #tpu.dot_dimension_numbers<[1], [0], [0], [1], [0, 0, 1, 1], [], []>} : vector<64x16xbf16>, vector<16x32xbf16>, vector<64x32xf32> -> vector<64x32xf32>
    %7 = arith.addf %0, %6 : vector<64x32xf32>
    %c0_7 = arith.constant 0 : index
    %c0_8 = arith.constant 0 : index
    %c1 = arith.constant 1 : index
    %c0_9 = arith.constant 0 : index
    %8 = vector.load %arg3[%c0_7, %c0_8, %c1, %c0_9] : memref<1x9x9x16xbf16, #tpu.memory_space<vmem>>, vector<1x8x8x16xbf16>
    %9 = vector.shape_cast %8 : vector<1x8x8x16xbf16> to vector<8x8x16xbf16>
    %10 = vector.shape_cast %9 : vector<8x8x16xbf16> to vector<64x16xbf16>
    %c1_10 = arith.constant 1 : index
    %c0_11 = arith.constant 0 : index
    %c0_12 = arith.constant 0 : index
    %11 = vector.load %arg4[%c1_10, %c0_11, %c0_12] : memref<4x16x32xbf16, #tpu.memory_space<vmem>>, vector<1x16x32xbf16>
    %12 = vector.shape_cast %11 : vector<1x16x32xbf16> to vector<16x32xbf16>
    %cst_13 = arith.constant dense<0.000000e+00> : vector<64x32xf32>
    %13 = tpu.matmul %10, %12, %cst_13 {dimension_numbers = #tpu.dot_dimension_numbers<[1], [0], [0], [1], [0, 0, 1, 1], [], []>} : vector<64x16xbf16>, vector<16x32xbf16>, vector<64x32xf32> -> vector<64x32xf32>
    %14 = arith.addf %7, %13 : vector<64x32xf32>
    %c0_14 = arith.constant 0 : index
    %c1_15 = arith.constant 1 : index
    %c0_16 = arith.constant 0 : index
    %c0_17 = arith.constant 0 : index
    %15 = vector.load %arg3[%c0_14, %c1_15, %c0_16, %c0_17] : memref<1x9x9x16xbf16, #tpu.memory_space<vmem>>, vector<1x8x8x16xbf16>
    %16 = vector.shape_cast %15 : vector<1x8x8x16xbf16> to vector<8x8x16xbf16>
    %17 = vector.shape_cast %16 : vector<8x8x16xbf16> to vector<64x16xbf16>
    %c2 = arith.constant 2 : index
    %c0_18 = arith.constant 0 : index
    %c0_19 = arith.constant 0 : index
    %18 = vector.load %arg4[%c2, %c0_18, %c0_19] : memref<4x16x32xbf16, #tpu.memory_space<vmem>>, vector<1x16x32xbf16>
    %19 = vector.shape_cast %18 : vector<1x16x32xbf16> to vector<16x32xbf16>
    %cst_20 = arith.constant dense<0.000000e+00> : vector<64x32xf32>
    %20 = tpu.matmul %17, %19, %cst_20 {dimension_numbers = #tpu.dot_dimension_numbers<[1], [0], [0], [1], [0, 0, 1, 1], [], []>} : vector<64x16xbf16>, vector<16x32xbf16>, vector<64x32xf32> -> vector<64x32xf32>
    %21 = arith.addf %14, %20 : vector<64x32xf32>
    %c0_21 = arith.constant 0 : index
    %c1_22 = arith.constant 1 : index
    %c1_23 = arith.constant 1 : index
    %c0_24 = arith.constant 0 : index
    %22 = vector.load %arg3[%c0_21, %c1_22, %c1_23, %c0_24] : memref<1x9x9x16xbf16, #tpu.memory_space<vmem>>, vector<1x8x8x16xbf16>
    %23 = vector.shape_cast %22 : vector<1x8x8x16xbf16> to vector<8x8x16xbf16>
    %24 = vector.shape_cast %23 : vector<8x8x16xbf16> to vector<64x16xbf16>
    %c3 = arith.constant 3 : index
    %c0_25 = arith.constant 0 : index
    %c0_26 = arith.constant 0 : index
    %25 = vector.load %arg4[%c3, %c0_25, %c0_26] : memref<4x16x32xbf16, #tpu.memory_space<vmem>>, vector<1x16x32xbf16>
    %26 = vector.shape_cast %25 : vector<1x16x32xbf16> to vector<16x32xbf16>
    %cst_27 = arith.constant dense<0.000000e+00> : vector<64x32xf32>
    %27 = tpu.matmul %24, %26, %cst_27 {dimension_numbers = #tpu.dot_dimension_numbers<[1], [0], [0], [1], [0, 0, 1, 1], [], []>} : vector<64x16xbf16>, vector<16x32xbf16>, vector<64x32xf32> -> vector<64x32xf32>
    %28 = arith.addf %21, %27 : vector<64x32xf32>
    %c0_28 = arith.constant 0 : index
    %c0_29 = arith.constant 0 : index
    %c0_30 = arith.constant 0 : index
    %c0_31 = arith.constant 0 : index
    %29 = vector.load %arg5[%c0_28, %c0_29, %c0_30, %c0_31] : memref<1x1x64x32xf32, #tpu.memory_space<vmem>>, vector<1x1x64x32xf32>
    %30 = vector.shape_cast %29 : vector<1x1x64x32xf32> to vector<64x32xf32>
    %31 = vector.shape_cast %28 : vector<64x32xf32> to vector<1x1x64x32xf32>
    tpu.vector_store %arg5[%c0_28, %c0_29, %c0_30, %c0_31], %31 {strides = array<i32>} : memref<1x1x64x32xf32, #tpu.memory_space<vmem>>, vector<1x1x64x32xf32>,
    %c0_i32 = arith.constant 0 : i32
    %32 = arith.cmpi eq, %arg2, %c0_i32 : i32
    %33 = arith.extui %32 : i1 to i32
    %c0_i32_32 = arith.constant 0 : i32
    %34 = arith.cmpi ne, %33, %c0_i32_32 : i32
    scf.if %34 {
      %cst_47 = arith.constant 0.000000e+00 : f32
      %52 = vector.broadcast %cst_47 : f32 to vector<1x32xf32>
      %c0_48 = arith.constant 0 : index
      %c0_49 = arith.constant 0 : index
      %c0_50 = arith.constant 0 : index
      %53 = vector.load %arg6[%c0_48, %c0_49, %c0_50] : memref<1x1x32xf32, #tpu.memory_space<vmem>>, vector<1x1x32xf32>
      %54 = vector.shape_cast %53 : vector<1x1x32xf32> to vector<1x32xf32>
      %55 = vector.shape_cast %52 : vector<1x32xf32> to vector<1x1x32xf32>
      tpu.vector_store %arg6[%c0_48, %c0_49, %c0_50], %55 {strides = array<i32>} : memref<1x1x32xf32, #tpu.memory_space<vmem>>, vector<1x1x32xf32>,
      %cst_51 = arith.constant 0.000000e+00 : f32
      %56 = vector.broadcast %cst_51 : f32 to vector<1x32xf32>
      %c0_52 = arith.constant 0 : index
      %c0_53 = arith.constant 0 : index
      %c0_54 = arith.constant 0 : index
      %57 = vector.load %arg7[%c0_52, %c0_53, %c0_54] : memref<1x1x32xf32, #tpu.memory_space<vmem>>, vector<1x1x32xf32>
      %58 = vector.shape_cast %57 : vector<1x1x32xf32> to vector<1x32xf32>
      %59 = vector.shape_cast %56 : vector<1x32xf32> to vector<1x1x32xf32>
      tpu.vector_store %arg7[%c0_52, %c0_53, %c0_54], %59 {strides = array<i32>} : memref<1x1x32xf32, #tpu.memory_space<vmem>>, vector<1x1x32xf32>,
    } else {
    }
    %c0_33 = arith.constant 0 : index
    %c0_34 = arith.constant 0 : index
    %c0_35 = arith.constant 0 : index
    %35 = vector.load %arg6[%c0_33, %c0_34, %c0_35] : memref<1x1x32xf32, #tpu.memory_space<vmem>>, vector<1x1x32xf32>
    %36 = vector.shape_cast %35 : vector<1x1x32xf32> to vector<1x32xf32>
    %cst_36 = arith.constant dense<0.000000e+00> : vector<32xf32>
    %37 = vector.multi_reduction <add>, %28, %cst_36 [0] : vector<64x32xf32> to vector<32xf32>
    %38 = vector.shape_cast %37 : vector<32xf32> to vector<1x32xf32>
    %39 = arith.addf %36, %38 : vector<1x32xf32>
    %c0_37 = arith.constant 0 : index
    %c0_38 = arith.constant 0 : index
    %c0_39 = arith.constant 0 : index
    %40 = vector.load %arg6[%c0_37, %c0_38, %c0_39] : memref<1x1x32xf32, #tpu.memory_space<vmem>>, vector<1x1x32xf32>
    %41 = vector.shape_cast %40 : vector<1x1x32xf32> to vector<1x32xf32>
    %42 = vector.shape_cast %39 : vector<1x32xf32> to vector<1x1x32xf32>
    tpu.vector_store %arg6[%c0_37, %c0_38, %c0_39], %42 {strides = array<i32>} : memref<1x1x32xf32, #tpu.memory_space<vmem>>, vector<1x1x32xf32>,
    %c0_40 = arith.constant 0 : index
    %c0_41 = arith.constant 0 : index
    %c0_42 = arith.constant 0 : index
    %43 = vector.load %arg7[%c0_40, %c0_41, %c0_42] : memref<1x1x32xf32, #tpu.memory_space<vmem>>, vector<1x1x32xf32>
    %44 = vector.shape_cast %43 : vector<1x1x32xf32> to vector<1x32xf32>
    %45 = arith.mulf %28, %28 : vector<64x32xf32>
    %cst_43 = arith.constant dense<0.000000e+00> : vector<32xf32>
    %46 = vector.multi_reduction <add>, %45, %cst_43 [0] : vector<64x32xf32> to vector<32xf32>
    %47 = vector.shape_cast %46 : vector<32xf32> to vector<1x32xf32>
    %48 = arith.addf %44, %47 : vector<1x32xf32>
    %c0_44 = arith.constant 0 : index
    %c0_45 = arith.constant 0 : index
    %c0_46 = arith.constant 0 : index
    %49 = vector.load %arg7[%c0_44, %c0_45, %c0_46] : memref<1x1x32xf32, #tpu.memory_space<vmem>>, vector<1x1x32xf32>
    %50 = vector.shape_cast %49 : vector<1x1x32xf32> to vector<1x32xf32>
    %51 = vector.shape_cast %48 : vector<1x32xf32> to vector<1x1x32xf32>
    tpu.vector_store %arg7[%c0_44, %c0_45, %c0_46], %51 {strides = array<i32>} : memref<1x1x32xf32, #tpu.memory_space<vmem>>, vector<1x1x32xf32>,
    return
  }
  func.func @transform_0(%arg0: i32, %arg1: i32, %arg2: i32) -> (i32, i32, i32, i32) {
    %c2_i32 = arith.constant 2 : i32
    %0 = arith.muli %arg2, %c2_i32 : i32
    %1 = arith.addi %0, %arg0 : i32
    %c0_i32 = arith.constant 0 : i32
    %c0_i32_0 = arith.constant 0 : i32
    %c0_i32_1 = arith.constant 0 : i32
    %c0_i32_2 = arith.constant 0 : i32
    return %1, %c0_i32, %c0_i32_0, %c0_i32_1 : i32, i32, i32, i32
  }
  func.func @transform_1(%arg0: i32, %arg1: i32, %arg2: i32) -> (i32, i32, i32) {
    %c0_i32 = arith.constant 0 : i32
    %c0_i32_0 = arith.constant 0 : i32
    return %arg2, %c0_i32, %arg1 : i32, i32, i32
  }
  func.func @transform_2(%arg0: i32, %arg1: i32, %arg2: i32) -> (i32, i32, i32, i32) {
    %c0_i32 = arith.constant 0 : i32
    %c0_i32_0 = arith.constant 0 : i32
    return %arg0, %arg2, %c0_i32, %arg1 : i32, i32, i32, i32
  }
  func.func @transform_3(%arg0: i32, %arg1: i32, %arg2: i32) -> (i32, i32, i32) {
    %c0_i32 = arith.constant 0 : i32
    %c0_i32_0 = arith.constant 0 : i32
    return %arg0, %c0_i32, %arg1 : i32, i32, i32
  }
  func.func @transform_4(%arg0: i32, %arg1: i32, %arg2: i32) -> (i32, i32, i32) {
    %c0_i32 = arith.constant 0 : i32
    %c0_i32_0 = arith.constant 0 : i32
    return %arg0, %c0_i32, %arg1 : i32, i32, i32
  }
}

module attributes {stable_mosaic.version = 11 : i64} {
  func.func @_bn_relu_se_apply_kernel(%arg0: i32, %arg1: i32, %arg2: memref<1x256x32xf32, #tpu.memory_space<vmem>>, %arg3: memref<1x32xf32, #tpu.memory_space<vmem>>, %arg4: memref<1x32xf32, #tpu.memory_space<vmem>>, %arg5: memref<1x1x32xf32, #tpu.memory_space<vmem>>, %arg6: memref<32x8xf32, #tpu.memory_space<vmem>>, %arg7: memref<1x8xf32, #tpu.memory_space<vmem>>, %arg8: memref<8x32xf32, #tpu.memory_space<vmem>>, %arg9: memref<1x32xf32, #tpu.memory_space<vmem>>, %arg10: memref<1x256x32xf32, #tpu.memory_space<vmem>>, %arg11: memref<1x32xf32, #tpu.memory_space<vmem>>) attributes {dimension_semantics = [#tpu.dimension_semantics<parallel>, #tpu.dimension_semantics<arbitrary>], iteration_bounds = array<i64: 2, 1>, scalar_prefetch = 0 : i64, scratch_operands = 1 : i64, tpu.core_type = #tpu.core_type<tc>, window_params = [{transform_indices = @transform_0, window_bounds = array<i64: 1, 256, 32>}, {pipeline_mode = #tpu.pipeline_mode<synchronous>, transform_indices = @transform_1, window_bounds = array<i64: 1, 32>}, {pipeline_mode = #tpu.pipeline_mode<synchronous>, transform_indices = @transform_2, window_bounds = array<i64: 1, 32>}, {transform_indices = @transform_3, window_bounds = array<i64: 1, 1, 32>}, {pipeline_mode = #tpu.pipeline_mode<synchronous>, transform_indices = @transform_4, window_bounds = array<i64: 32, 8>}, {pipeline_mode = #tpu.pipeline_mode<synchronous>, transform_indices = @transform_5, window_bounds = array<i64: 1, 8>}, {pipeline_mode = #tpu.pipeline_mode<synchronous>, transform_indices = @transform_6, window_bounds = array<i64: 8, 32>}, {pipeline_mode = #tpu.pipeline_mode<synchronous>, transform_indices = @transform_7, window_bounds = array<i64: 1, 32>}, {transform_indices = @transform_8, window_bounds = array<i64: 1, 256, 32>}]} {
    %c0_i32 = arith.constant 0 : i32
    %0 = arith.cmpi eq, %arg1, %c0_i32 : i32
    %1 = arith.extui %0 : i1 to i32
    %c0_i32_0 = arith.constant 0 : i32
    %2 = arith.cmpi ne, %1, %c0_i32_0 : i32
    scf.if %2 {
      %c0_12 = arith.constant 0 : index
      %c0_13 = arith.constant 0 : index
      %c0_14 = arith.constant 0 : index
      %19 = vector.load %arg5[%c0_12, %c0_13, %c0_14] : memref<1x1x32xf32, #tpu.memory_space<vmem>>, vector<1x1x32xf32>
      %20 = vector.shape_cast %19 : vector<1x1x32xf32> to vector<1x32xf32>
      %c0_15 = arith.constant 0 : index
      %c0_16 = arith.constant 0 : index
      %21 = vector.load %arg6[%c0_15, %c0_16] : memref<32x8xf32, #tpu.memory_space<vmem>>, vector<32x8xf32>
      %cst_17 = arith.constant dense<0.000000e+00> : vector<1x8xf32>
      %22 = tpu.matmul %20, %21, %cst_17 {dimension_numbers = #tpu.dot_dimension_numbers<[1], [0], [0], [1], [0, 0, 1, 1], [], []>} : vector<1x32xf32>, vector<32x8xf32>, vector<1x8xf32> -> vector<1x8xf32>
      %c0_18 = arith.constant 0 : index
      %c0_19 = arith.constant 0 : index
      %23 = vector.load %arg7[%c0_18, %c0_19] : memref<1x8xf32, #tpu.memory_space<vmem>>, vector<1x8xf32>
      %24 = arith.addf %22, %23 : vector<1x8xf32>
      %cst_20 = arith.constant 0.000000e+00 : f32
      %25 = vector.broadcast %cst_20 : f32 to vector<1x8xf32>
      %26 = arith.maximumf %24, %25 : vector<1x8xf32>
      %c0_21 = arith.constant 0 : index
      %c0_22 = arith.constant 0 : index
      %27 = vector.load %arg8[%c0_21, %c0_22] : memref<8x32xf32, #tpu.memory_space<vmem>>, vector<8x32xf32>
      %cst_23 = arith.constant dense<0.000000e+00> : vector<1x32xf32>
      %28 = tpu.matmul %26, %27, %cst_23 {dimension_numbers = #tpu.dot_dimension_numbers<[1], [0], [0], [1], [0, 0, 1, 1], [], []>} : vector<1x8xf32>, vector<8x32xf32>, vector<1x32xf32> -> vector<1x32xf32>
      %c0_24 = arith.constant 0 : index
      %c0_25 = arith.constant 0 : index
      %29 = vector.load %arg9[%c0_24, %c0_25] : memref<1x32xf32, #tpu.memory_space<vmem>>, vector<1x32xf32>
      %30 = arith.addf %28, %29 : vector<1x32xf32>
      %cst_26 = arith.constant 0.166666672 : f32
      %31 = vector.broadcast %cst_26 : f32 to vector<1x32xf32>
      %32 = arith.mulf %30, %31 : vector<1x32xf32>
      %cst_27 = arith.constant 5.000000e-01 : f32
      %33 = vector.broadcast %cst_27 : f32 to vector<1x32xf32>
      %34 = arith.addf %32, %33 : vector<1x32xf32>
      %cst_28 = arith.constant 0.000000e+00 : f32
      %cst_29 = arith.constant 1.000000e+00 : f32
      %35 = vector.broadcast %cst_28 : f32 to vector<1x32xf32>
      %36 = arith.maximumf %35, %34 : vector<1x32xf32>
      %37 = vector.broadcast %cst_29 : f32 to vector<1x32xf32>
      %38 = arith.minimumf %37, %36 : vector<1x32xf32>
      %c0_30 = arith.constant 0 : index
      %c0_31 = arith.constant 0 : index
      %39 = vector.load %arg11[%c0_30, %c0_31] : memref<1x32xf32, #tpu.memory_space<vmem>>, vector<1x32xf32>
      tpu.vector_store %arg11[%c0_30, %c0_31], %38 {strides = array<i32>} : memref<1x32xf32, #tpu.memory_space<vmem>>, vector<1x32xf32>,
    } else {
    }
    %c0 = arith.constant 0 : index
    %c0_1 = arith.constant 0 : index
    %c0_2 = arith.constant 0 : index
    %3 = vector.load %arg2[%c0, %c0_1, %c0_2] : memref<1x256x32xf32, #tpu.memory_space<vmem>>, vector<1x256x32xf32>
    %4 = vector.shape_cast %3 : vector<1x256x32xf32> to vector<256x32xf32>
    %c0_3 = arith.constant 0 : index
    %c0_4 = arith.constant 0 : index
    %5 = vector.load %arg3[%c0_3, %c0_4] : memref<1x32xf32, #tpu.memory_space<vmem>>, vector<1x32xf32>
    %6 = vector.broadcast %5 : vector<1x32xf32> to vector<256x32xf32>
    %7 = arith.mulf %4, %6 : vector<256x32xf32>
    %c0_5 = arith.constant 0 : index
    %c0_6 = arith.constant 0 : index
    %8 = vector.load %arg4[%c0_5, %c0_6] : memref<1x32xf32, #tpu.memory_space<vmem>>, vector<1x32xf32>
    %9 = vector.broadcast %8 : vector<1x32xf32> to vector<256x32xf32>
    %10 = arith.addf %7, %9 : vector<256x32xf32>
    %cst = arith.constant 0.000000e+00 : f32
    %11 = vector.broadcast %cst : f32 to vector<256x32xf32>
    %12 = arith.maximumf %10, %11 : vector<256x32xf32>
    %c0_7 = arith.constant 0 : index
    %c0_8 = arith.constant 0 : index
    %13 = vector.load %arg11[%c0_7, %c0_8] : memref<1x32xf32, #tpu.memory_space<vmem>>, vector<1x32xf32>
    %14 = vector.broadcast %13 : vector<1x32xf32> to vector<256x32xf32>
    %15 = arith.mulf %12, %14 : vector<256x32xf32>
    %c0_9 = arith.constant 0 : index
    %c0_10 = arith.constant 0 : index
    %c0_11 = arith.constant 0 : index
    %16 = vector.load %arg10[%c0_9, %c0_10, %c0_11] : memref<1x256x32xf32, #tpu.memory_space<vmem>>, vector<1x256x32xf32>
    %17 = vector.shape_cast %16 : vector<1x256x32xf32> to vector<256x32xf32>
    %18 = vector.shape_cast %15 : vector<256x32xf32> to vector<1x256x32xf32>
    tpu.vector_store %arg10[%c0_9, %c0_10, %c0_11], %18 {strides = array<i32>} : memref<1x256x32xf32, #tpu.memory_space<vmem>>, vector<1x256x32xf32>,
    return
  }
  func.func @transform_0(%arg0: i32, %arg1: i32) -> (i32, i32, i32) {
    %c0_i32 = arith.constant 0 : i32
    %c0_i32_0 = arith.constant 0 : i32
    return %arg0, %arg1, %c0_i32 : i32, i32, i32
  }
  func.func @transform_1(%arg0: i32, %arg1: i32) -> (i32, i32) {
    %c0_i32 = arith.constant 0 : i32
    %c0_i32_0 = arith.constant 0 : i32
    %c0_i32_1 = arith.constant 0 : i32
    return %c0_i32, %c0_i32_0 : i32, i32
  }
  func.func @transform_2(%arg0: i32, %arg1: i32) -> (i32, i32) {
    %c0_i32 = arith.constant 0 : i32
    %c0_i32_0 = arith.constant 0 : i32
    %c0_i32_1 = arith.constant 0 : i32
    return %c0_i32, %c0_i32_0 : i32, i32
  }
  func.func @transform_3(%arg0: i32, %arg1: i32) -> (i32, i32, i32) {
    %c0_i32 = arith.constant 0 : i32
    %c0_i32_0 = arith.constant 0 : i32
    %c0_i32_1 = arith.constant 0 : i32
    return %arg0, %c0_i32, %c0_i32_0 : i32, i32, i32
  }
  func.func @transform_4(%arg0: i32, %arg1: i32) -> (i32, i32) {
    %c0_i32 = arith.constant 0 : i32
    %c0_i32_0 = arith.constant 0 : i32
    %c0_i32_1 = arith.constant 0 : i32
    return %c0_i32, %c0_i32_0 : i32, i32
  }
  func.func @transform_5(%arg0: i32, %arg1: i32) -> (i32, i32) {
    %c0_i32 = arith.constant 0 : i32
    %c0_i32_0 = arith.constant 0 : i32
    %c0_i32_1 = arith.constant 0 : i32
    return %c0_i32, %c0_i32_0 : i32, i32
  }
  func.func @transform_6(%arg0: i32, %arg1: i32) -> (i32, i32) {
    %c0_i32 = arith.constant 0 : i32
    %c0_i32_0 = arith.constant 0 : i32
    %c0_i32_1 = arith.constant 0 : i32
    return %c0_i32, %c0_i32_0 : i32, i32
  }
  func.func @transform_7(%arg0: i32, %arg1: i32) -> (i32, i32) {
    %c0_i32 = arith.constant 0 : i32
    %c0_i32_0 = arith.constant 0 : i32
    %c0_i32_1 = arith.constant 0 : i32
    return %c0_i32, %c0_i32_0 : i32, i32
  }
  func.func @transform_8(%arg0: i32, %arg1: i32) -> (i32, i32, i32) {
    %c0_i32 = arith.constant 0 : i32
    %c0_i32_0 = arith.constant 0 : i32
    return %arg0, %arg1, %c0_i32 : i32, i32, i32
  }
}

module attributes {stable_mosaic.version = 11 : i64} {
  func.func @_se_pool_kernel(%arg0: i32, %arg1: i32, %arg2: memref<1x256x32xf32, #tpu.memory_space<vmem>>, %arg3: memref<1x32xf32, #tpu.memory_space<vmem>>, %arg4: memref<1x32xf32, #tpu.memory_space<vmem>>, %arg5: memref<1x1x32xf32, #tpu.memory_space<vmem>>) attributes {dimension_semantics = [#tpu.dimension_semantics<parallel>, #tpu.dimension_semantics<arbitrary>], iteration_bounds = array<i64: 2, 1>, scalar_prefetch = 0 : i64, scratch_operands = 0 : i64, tpu.core_type = #tpu.core_type<tc>, window_params = [{transform_indices = @transform_0, window_bounds = array<i64: 1, 256, 32>}, {pipeline_mode = #tpu.pipeline_mode<synchronous>, transform_indices = @transform_1, window_bounds = array<i64: 1, 32>}, {pipeline_mode = #tpu.pipeline_mode<synchronous>, transform_indices = @transform_2, window_bounds = array<i64: 1, 32>}, {transform_indices = @transform_3, window_bounds = array<i64: 1, 1, 32>}]} {
    %c0 = arith.constant 0 : index
    %c0_0 = arith.constant 0 : index
    %c0_1 = arith.constant 0 : index
    %0 = vector.load %arg2[%c0, %c0_0, %c0_1] : memref<1x256x32xf32, #tpu.memory_space<vmem>>, vector<1x256x32xf32>
    %1 = vector.shape_cast %0 : vector<1x256x32xf32> to vector<256x32xf32>
    %c0_2 = arith.constant 0 : index
    %c0_3 = arith.constant 0 : index
    %2 = vector.load %arg3[%c0_2, %c0_3] : memref<1x32xf32, #tpu.memory_space<vmem>>, vector<1x32xf32>
    %3 = vector.broadcast %2 : vector<1x32xf32> to vector<256x32xf32>
    %4 = arith.mulf %1, %3 : vector<256x32xf32>
    %c0_4 = arith.constant 0 : index
    %c0_5 = arith.constant 0 : index
    %5 = vector.load %arg4[%c0_4, %c0_5] : memref<1x32xf32, #tpu.memory_space<vmem>>, vector<1x32xf32>
    %6 = vector.broadcast %5 : vector<1x32xf32> to vector<256x32xf32>
    %7 = arith.addf %4, %6 : vector<256x32xf32>
    %cst = arith.constant 0.000000e+00 : f32
    %8 = vector.broadcast %cst : f32 to vector<256x32xf32>
    %9 = arith.maximumf %7, %8 : vector<256x32xf32>
    %c0_i32 = arith.constant 0 : i32
    %10 = arith.cmpi eq, %arg1, %c0_i32 : i32
    %11 = arith.extui %10 : i1 to i32
    %c0_i32_6 = arith.constant 0 : i32
    %12 = arith.cmpi ne, %11, %c0_i32_6 : i32
    scf.if %12 {
      %cst_14 = arith.constant 0.000000e+00 : f32
      %21 = vector.broadcast %cst_14 : f32 to vector<1x32xf32>
      %c0_15 = arith.constant 0 : index
      %c0_16 = arith.constant 0 : index
      %c0_17 = arith.constant 0 : index
      %22 = vector.load %arg5[%c0_15, %c0_16, %c0_17] : memref<1x1x32xf32, #tpu.memory_space<vmem>>, vector<1x1x32xf32>
      %23 = vector.shape_cast %22 : vector<1x1x32xf32> to vector<1x32xf32>
      %24 = vector.shape_cast %21 : vector<1x32xf32> to vector<1x1x32xf32>
      tpu.vector_store %arg5[%c0_15, %c0_16, %c0_17], %24 {strides = array<i32>} : memref<1x1x32xf32, #tpu.memory_space<vmem>>, vector<1x1x32xf32>,
    } else {
    }
    %c0_7 = arith.constant 0 : index
    %c0_8 = arith.constant 0 : index
    %c0_9 = arith.constant 0 : index
    %13 = vector.load %arg5[%c0_7, %c0_8, %c0_9] : memref<1x1x32xf32, #tpu.memory_space<vmem>>, vector<1x1x32xf32>
    %14 = vector.shape_cast %13 : vector<1x1x32xf32> to vector<1x32xf32>
    %cst_10 = arith.constant dense<0.000000e+00> : vector<32xf32>
    %15 = vector.multi_reduction <add>, %9, %cst_10 [0] : vector<256x32xf32> to vector<32xf32>
    %16 = vector.shape_cast %15 : vector<32xf32> to vector<1x32xf32>
    %17 = arith.addf %14, %16 : vector<1x32xf32>
    %c0_11 = arith.constant 0 : index
    %c0_12 = arith.constant 0 : index
    %c0_13 = arith.constant 0 : index
    %18 = vector.load %arg5[%c0_11, %c0_12, %c0_13] : memref<1x1x32xf32, #tpu.memory_space<vmem>>, vector<1x1x32xf32>
    %19 = vector.shape_cast %18 : vector<1x1x32xf32> to vector<1x32xf32>
    %20 = vector.shape_cast %17 : vector<1x32xf32> to vector<1x1x32xf32>
    tpu.vector_store %arg5[%c0_11, %c0_12, %c0_13], %20 {strides = array<i32>} : memref<1x1x32xf32, #tpu.memory_space<vmem>>, vector<1x1x32xf32>,
    return
  }
  func.func @transform_0(%arg0: i32, %arg1: i32) -> (i32, i32, i32) {
    %c0_i32 = arith.constant 0 : i32
    %c0_i32_0 = arith.constant 0 : i32
    return %arg0, %arg1, %c0_i32 : i32, i32, i32
  }
  func.func @transform_1(%arg0: i32, %arg1: i32) -> (i32, i32) {
    %c0_i32 = arith.constant 0 : i32
    %c0_i32_0 = arith.constant 0 : i32
    %c0_i32_1 = arith.constant 0 : i32
    return %c0_i32, %c0_i32_0 : i32, i32
  }
  func.func @transform_2(%arg0: i32, %arg1: i32) -> (i32, i32) {
    %c0_i32 = arith.constant 0 : i32
    %c0_i32_0 = arith.constant 0 : i32
    %c0_i32_1 = arith.constant 0 : i32
    return %c0_i32, %c0_i32_0 : i32, i32
  }
  func.func @transform_3(%arg0: i32, %arg1: i32) -> (i32, i32, i32) {
    %c0_i32 = arith.constant 0 : i32
    %c0_i32_0 = arith.constant 0 : i32
    %c0_i32_1 = arith.constant 0 : i32
    return %arg0, %c0_i32, %c0_i32_0 : i32, i32, i32
  }
}

</mosaic_0001>

<llo_original>
// kernel: unet_up_forward.4
$region0: #{unet_up_forward.4}
  #allocation0 [shape = 'u32[]', space=smem, size = 0x4, offset = 0x4, fixed_abs, tag = 'smem constant byte address 0x4 - core index']
  #allocation1 [shape = 'u32[144,128]{1,0:T(1,128)}', space=vmem, size = 0x12000, scoped, tag = 'internal scratch']
  %s0 = inlined_call_operand.vmem [shape: f32[2,256,32], index: 0, kind: input, shape index: {}]
  %s1 = inlined_call_operand.vmem [shape: f32[1,32], index: 1, kind: input, shape index: {}]
  %s2 = inlined_call_operand.vmem [shape: f32[1,32], index: 2, kind: input, shape index: {}]
  %s3 = inlined_call_operand.vmem [shape: f32[2,1,32], index: 3, kind: output, shape index: {}]
  %s4 = sld [smem:[#allocation0]]
  $region49: #{unet_up_forward.4} parent=0
    _
  %s6 = ssub.s32 1, %s4
  %s7 = scalar_select 0, %s6, %s4
  loop: start=0, step=1, limit=4
  $region2: #{unet_up_forward.4} parent=0 // loop_pre_header
    _
  $region3: #{unet_up_forward.4} parent=0 // loop_header
    %s9 = sphi 0, %s13
    %p10 = scmp.ge.s32.totalorder %s9, 4
    %s16 = sphi 0, %s28
    %s17 = sphi 0, %s24
    %s18 = sphi 0, %s16
    %s19 = sphi 0, %s17
    %s20 = sphi 0, %s18
    %s21 = sphi 0, %s19
    %s33 = sphi 0, %s35
    %s36 = sphi 0, %s33
    %s37 = sphi 0, %s36
    %s53 = sphi 0, %s37
    %s57 = sphi 0, %s57
    %s59 = sphi 0, %s57
    %s60 = sphi 0, %s59
    %s74 = sphi 0, %s60
    %s78 = sphi 0, %s78
    %s80 = sphi 0, %s78
    %s81 = sphi 0, %s80
    %s95 = sphi 0, %s81
    %s101 = sphi 0, %s103
    %s104 = sphi 0, %s101
    %s105 = sphi 0, %s104
    %s121 = sphi 0, %s105
  $region4: #{unet_up_forward.4} parent=0 // loop_header_branch
    %12 = sbr.rel (%p10) target = $region8
  $region5: #{unet_up_forward.4} parent=0 // loop_body
    %s14 = ssub.s32 %s9, 1
    %s15 = ssub.s32 %s9, 2
    %s22 = sadd.s32 1, %s17
    %p23 = scmp.ge.s32.totalorder %s22, 1
    %s24 = scalar_select %p23, 0, %s22
    %s25 = sadd.s32 1, %s16
    %s26 = scalar_select %p23, %s25, %s16
    %p27 = scmp.ge.s32.totalorder %s26, 2
    %s28 = scalar_select %p27, 0, %s26
    %s29 = ssub.s32 %s16, %s28
    %s30 = ssub.s32 %s17, %s24
    %s31 = sor.u32 %s29, %s30
    %p32 = scmp.eq.s32.totalorder %s31, 0
    %s34 = sadd.s32 %s33, 1
    %s35 = scalar_select %p32, %s33, %s34
    %p38 = pneg %p32
    %p39 = scmp.eq.s32.totalorder %s9, 1
    %p40 = por %p38, %p39
    %p41 = scmp.ne.s32.totalorder %s33, %s36
    %p42 = scmp.eq.s32.totalorder %s9, 0
    %p43 = por %p41, %p42
    %p44 = scmp.ne.s32.totalorder %s33, %s36
    %p45 = scmp.eq.s32.totalorder %s14, 1
    %p46 = por %p44, %p45
    %p47 = scmp.ne.s32.totalorder %s36, %s37
    %p48 = scmp.eq.s32.totalorder %s14, 0
    %p49 = por %p47, %p48
    %p50 = scmp.ne.s32.totalorder %s36, %s37
    %p51 = scmp.eq.s32.totalorder %s15, 1
    %p52 = por %p50, %p51
    %p54 = scmp.ne.s32.totalorder %s37, %s53
    %p55 = scmp.eq.s32.totalorder %s15, 0
    %p56 = por %p54, %p55
    %s58 = sadd.s32 %s57, 1
    %p61 = scmp.eq.s32.totalorder %s9, 1
    %p62 = scmp.ne.s32.totalorder %s57, %s59
    %p63 = scmp.eq.s32.totalorder %s9, 0
    %p64 = por %p62, %p63
    %p65 = scmp.ne.s32.totalorder %s57, %s59
    %p66 = scmp.eq.s32.totalorder %s14, 1
    %p67 = por %p65, %p66
    %p68 = scmp.ne.s32.totalorder %s59, %s60
    %p69 = scmp.eq.s32.totalorder %s14, 0
    %p70 = por %p68, %p69
    %p71 = scmp.ne.s32.totalorder %s59, %s60
    %p72 = scmp.eq.s32.totalorder %s15, 1
    %p73 = por %p71, %p72
    %p75 = scmp.ne.s32.totalorder %s60, %s74
    %p76 = scmp.eq.s32.totalorder %s15, 0
    %p77 = por %p75, %p76
    %s79 = sadd.s32 %s78, 1
    %p82 = scmp.eq.s32.totalorder %s9, 1
    %p83 = scmp.ne.s32.totalorder %s78, %s80
    %p84 = scmp.eq.s32.totalorder %s9, 0
    %p85 = por %p83, %p84
    %p86 = scmp.ne.s32.totalorder %s78, %s80
    %p87 = scmp.eq.s32.totalorder %s14, 1
    %p88 = por %p86, %p87
    %p89 = scmp.ne.s32.totalorder %s80, %s81
    %p90 = scmp.eq.s32.totalorder %s14, 0
    %p91 = por %p89, %p90
    %p92 = scmp.ne.s32.totalorder %s80, %s81
    %p93 = scmp.eq.s32.totalorder %s15, 1
    %p94 = por %p92, %p93
    %p96 = scmp.ne.s32.totalorder %s81, %s95
    %p97 = scmp.eq.s32.totalorder %s15, 0
    %p98 = por %p96, %p97
    %s99 = ssub.s32 %s16, %s28
    %p100 = scmp.eq.s32.totalorder %s99, 0
    %s102 = sadd.s32 %s101, 1
    %s103 = scalar_select %p100, %s101, %s102
    %p106 = pneg %p100
    %p107 = scmp.eq.s32.totalorder %s9, 1
    %p108 = por %p106, %p107
    %p109 = scmp.ne.s32.totalorder %s101, %s104
    %p110 = scmp.eq.s32.totalorder %s9, 0
    %p111 = por %p109, %p110
    %p112 = scmp.ne.s32.totalorder %s101, %s104
    %p113 = scmp.eq.s32.totalorder %s14, 1
    %p114 = por %p112, %p113
    %p115 = scmp.ne.s32.totalorder %s104, %s105
    %p116 = scmp.eq.s32.totalorder %s14, 0
    %p117 = por %p115, %p116
    %p118 = scmp.ne.s32.totalorder %s104, %s105
    %p119 = scmp.eq.s32.totalorder %s15, 1
    %p120 = por %p118, %p119
    %p122 = scmp.ne.s32.totalorder %s105, %s121
    %p123 = scmp.eq.s32.totalorder %s15, 0
    %p124 = por %p122, %p123
    %p125 = scmp.le.s32.totalorder 1, %s9
    %p126 = scmp.lt.s32.totalorder %s9, 3
    %p127 = pnand %p125, %p126
    %p128 = pneg %p127
    // Predicated region
    $region9: #{unet_up_forward.4} parent=5 // pred_check
      _
    $region10: #{unet_up_forward.4} parent=5 // pred_check_branch
      %130 = sbr.rel (%p127) target = $region12
    $region11: #{unet_up_forward.4} parent=5 // pred_region
      %s131 = ssub.s32 %s9, 1
      // Predicated region
      $region13: #{unet_up_forward.4} parent=11 // pred_check
        %p132 = pneg %p70
      $region14: #{unet_up_forward.4} parent=11 // pred_check_branch
        %134 = sbr.rel (%p132) target = $region16
      $region15: #{unet_up_forward.4} parent=11 // pred_region
        _
      $region16: #{unet_up_forward.4} parent=11 // pred_fallthru
        _
      // Predicated region
      $region17: #{unet_up_forward.4} parent=11 // pred_check
        %p135 = pneg %p91
      $region18: #{unet_up_forward.4} parent=11 // pred_check_branch
        %137 = sbr.rel (%p135) target = $region20
      $region19: #{unet_up_forward.4} parent=11 // pred_region
        _
      $region20: #{unet_up_forward.4} parent=11 // pred_fallthru
        _
    $region12: #{unet_up_forward.4} parent=5 // pred_fallthru
      _
    %p138 = scmp.lt.s32.totalorder %s9, 2
    // Predicated region
    $region21: #{unet_up_forward.4} parent=5 // pred_check
      %p139 = pneg %p138
    $region22: #{unet_up_forward.4} parent=5 // pred_check_branch
      %141 = sbr.rel (%p139) target = $region24
    $region23: #{unet_up_forward.4} parent=5 // pred_region
      // Predicated region
      $region25: #{unet_up_forward.4} parent=23 // pred_check
        %p142 = pneg %p43
      $region26: #{unet_up_forward.4} parent=23 // pred_check_branch
        %144 = sbr.rel (%p142) target = $region28
      $region27: #{unet_up_forward.4} parent=23 // pred_region
        %s145 = smul.u32 32, %s17
        %p146 = scmp.lt.s32.totalorder %s16, 1
        %s147 = scalar_select %p146, %s16, 1
        %p148 = scmp.lt.s32.totalorder %s145, 31
        %s149 = scalar_select %p148, %s145, 31
        %s150 = smul.addr %s147, 32
        %s151 = sadd.s32 %s149, %s150
        %s152 = smul.addr %s151, 8
        %s153 = scalar_lea.vmem %s0, %s152
        %s154 = smul.u32 32, %s17
      $region28: #{unet_up_forward.4} parent=23 // pred_fallthru
        _
    $region24: #{unet_up_forward.4} parent=5 // pred_fallthru
      _
    %p155 = scmp.le.s32.totalorder 1, %s9
    %p156 = scmp.lt.s32.totalorder %s9, 3
    %p157 = pnand %p155, %p156
    %p158 = pneg %p157
    // Predicated region
    $region29: #{unet_up_forward.4} parent=5 // pred_check
      _
    $region30: #{unet_up_forward.4} parent=5 // pred_check_branch
      %160 = sbr.rel (%p157) target = $region32
    $region31: #{unet_up_forward.4} parent=5 // pred_region
      %s161 = ssub.s32 %s9, 1
      %s162 = smul.u32 32, %s19
      %p163 = scmp.lt.s32.totalorder %s18, 1
      %s164 = scalar_select %p163, %s18, 1
      %p165 = scmp.lt.s32.totalorder %s162, 31
      %s166 = scalar_select %p165, %s162, 31
      %s167 = smul.addr %s164, 32
      %s168 = sadd.s32 %s166, %s167
      %s169 = smul.addr %s168, 8
      %s170 = scalar_lea.vmem %s0, %s169
      %p171 = pneg %p49
      %p172 = pneg %p46
      %p173 = pneg %p70
      %p174 = pneg %p67
      %p175 = pneg %p91
      %p176 = pneg %p88
      %p177 = pneg %p117
      %p178 = pneg %p114
      %p179 = scmp.lt.s32.totalorder %s18, 1
      %s180 = scalar_select %p179, %s18, 1
      %s181 = scalar_lea.vmem %s3, %s180
      %s182 = smul.u32 32, %s19
      %p183 = scmp.lt.s32.totalorder %s18, 1
      %s184 = scalar_select %p183, %s18, 1
      %p185 = scmp.lt.s32.totalorder %s182, 31
      %s186 = scalar_select %p185, %s182, 31
      %s187 = smul.addr %s184, 32
      %s188 = sadd.s32 %s186, %s187
      %s189 = smul.addr %s188, 8
      %s190 = scalar_lea.vmem %s0, %s189
      %s191 = smul.u32 32, %s19
      %p192 = scmp.lt.s32.totalorder %s18, 1
      %s193 = scalar_select %p192, %s18, 1
      %s194 = scalar_lea.vmem %s3, %s193
      %v195 = vld [vmem:[%s190] sm:$0xff]
      %v196 = vld [vmem:[%s190 + $0x8] sm:$0xff]
      %v197 = vld [vmem:[%s190 + $0x10] sm:$0xff]
      %v198 = vld [vmem:[%s190 + $0x18] sm:$0xff]
      %v199 = vld [vmem:[%s190 + $0x20] sm:$0xff]
      %v200 = vld [vmem:[%s190 + $0x28] sm:$0xff]
      %v201 = vld [vmem:[%s190 + $0x30] sm:$0xff]
      %v202 = vld [vmem:[%s190 + $0x38] sm:$0xff]
      %v203 = vld [vmem:[%s190 + $0x40] sm:$0xff]
      %v204 = vld [vmem:[%s190 + $0x48] sm:$0xff]
      %v205 = vld [vmem:[%s190 + $0x50] sm:$0xff]
      %v206 = vld [vmem:[%s190 + $0x58] sm:$0xff]
      %v207 = vld [vmem:[%s190 + $0x60] sm:$0xff]
      %v208 = vld [vmem:[%s190 + $0x68] sm:$0xff]
      %v209 = vld [vmem:[%s190 + $0x70] sm:$0xff]
      %v210 = vld [vmem:[%s190 + $0x78] sm:$0xff]
      %v211 = vld [vmem:[%s190 + $0x80] sm:$0xff]
      %v212 = vld [vmem:[%s190 + $0x88] sm:$0xff]
      %v213 = vld [vmem:[%s190 + $0x90] sm:$0xff]
      %v214 = vld [vmem:[%s190 + $0x98] sm:$0xff]
      %v215 = vld [vmem:[%s190 + $0xa0] sm:$0xff]
      %v216 = vld [vmem:[%s190 + $0xa8] sm:$0xff]
      %v217 = vld [vmem:[%s190 + $0xb0] sm:$0xff]
      %v218 = vld [vmem:[%s190 + $0xb8] sm:$0xff]
      %v219 = vld [vmem:[%s190 + $0xc0] sm:$0xff]
      %v220 = vld [vmem:[%s190 + $0xc8] sm:$0xff]
      %v221 = vld [vmem:[%s190 + $0xd0] sm:$0xff]
      %v222 = vld [vmem:[%s190 + $0xd8] sm:$0xff]
      %v223 = vld [vmem:[%s190 + $0xe0] sm:$0xff]
      %v224 = vld [vmem:[%s190 + $0xe8] sm:$0xff]
      %v225 = vld [vmem:[%s190 + $0xf0] sm:$0xff]
      %v226 = vld [vmem:[%s190 + $0xf8] sm:$0xff]
      %v227 = vld [vmem:[%s1] sm:$0x1]
      %v229 = vlaneseq
      %v230 = vshrl.u32 %v229, 7
      %v231 = vsub.s32 0, %v230
      %v232 = vrot.slane %v227, %v231
      %v234 = vmul.f32 %v195, %v232
      %v235 = vmul.f32 %v196, %v232
      %v236 = vmul.f32 %v197, %v232
      %v237 = vmul.f32 %v198, %v232
      %v238 = vmul.f32 %v199, %v232
      %v239 = vmul.f32 %v200, %v232
      %v240 = vmul.f32 %v201, %v232
      %v241 = vmul.f32 %v202, %v232
      %v242 = vmul.f32 %v203, %v232
      %v243 = vmul.f32 %v204, %v232
      %v244 = vmul.f32 %v205, %v232
      %v245 = vmul.f32 %v206, %v232
      %v246 = vmul.f32 %v207, %v232
      %v247 = vmul.f32 %v208, %v232
      %v248 = vmul.f32 %v209, %v232
      %v249 = vmul.f32 %v210, %v232
      %v250 = vmul.f32 %v211, %v232
      %v251 = vmul.f32 %v212, %v232
      %v252 = vmul.f32 %v213, %v232
      %v253 = vmul.f32 %v214, %v232
      %v254 = vmul.f32 %v215, %v232
      %v255 = vmul.f32 %v216, %v232
      %v256 = vmul.f32 %v217, %v232
      %v257 = vmul.f32 %v218, %v232
      %v258 = vmul.f32 %v219, %v232
      %v259 = vmul.f32 %v220, %v232
      %v260 = vmul.f32 %v221, %v232
      %v261 = vmul.f32 %v222, %v232
      %v262 = vmul.f32 %v223, %v232
      %v263 = vmul.f32 %v224, %v232
      %v264 = vmul.f32 %v225, %v232
      %v265 = vmul.f32 %v226, %v232
      %v266 = vld [vmem:[%s2] sm:$0x1]
      %v268 = vlaneseq
      %v269 = vshrl.u32 %v268, 7
      %v270 = vsub.s32 0, %v269
      %v271 = vrot.slane %v266, %v270
      %v273 = vadd.f32 %v234, %v271
      %v274 = vadd.f32 %v235, %v271
      %v275 = vadd.f32 %v236, %v271
      %v276 = vadd.f32 %v237, %v271
      %v277 = vadd.f32 %v238, %v271
      %v278 = vadd.f32 %v239, %v271
      %v279 = vadd.f32 %v240, %v271
      %v280 = vadd.f32 %v241, %v271
      %v281 = vadd.f32 %v242, %v271
      %v282 = vadd.f32 %v243, %v271
      %v283 = vadd.f32 %v244, %v271
      %v284 = vadd.f32 %v245, %v271
      %v285 = vadd.f32 %v246, %v271
      %v286 = vadd.f32 %v247, %v271
      %v287 = vadd.f32 %v248, %v271
      %v288 = vadd.f32 %v249, %v271
      %v289 = vadd.f32 %v250, %v271
      %v290 = vadd.f32 %v251, %v271
      %v291 = vadd.f32 %v252, %v271
      %v292 = vadd.f32 %v253, %v271
      %v293 = vadd.f32 %v254, %v271
      %v294 = vadd.f32 %v255, %v271
      %v295 = vadd.f32 %v256, %v271
      %v296 = vadd.f32 %v257, %v271
      %v297 = vadd.f32 %v258, %v271
      %v298 = vadd.f32 %v259, %v271
      %v299 = vadd.f32 %v260, %v271
      %v300 = vadd.f32 %v261, %v271
      %v301 = vadd.f32 %v262, %v271
      %v302 = vadd.f32 %v263, %v271
      %v303 = vadd.f32 %v264, %v271
      %v304 = vadd.f32 %v265, %v271
      %v305 = vmax.f32 %v273, 0.0
      %v306 = vmax.f32 %v274, 0.0
      %v307 = vmax.f32 %v275, 0.0
      %v308 = vmax.f32 %v276, 0.0
      %v309 = vmax.f32 %v277, 0.0
      %v310 = vmax.f32 %v278, 0.0
      %v311 = vmax.f32 %v279, 0.0
      %v312 = vmax.f32 %v280, 0.0
      %v313 = vmax.f32 %v281, 0.0
      %v314 = vmax.f32 %v282, 0.0
      %v315 = vmax.f32 %v283, 0.0
      %v316 = vmax.f32 %v284, 0.0
      %v317 = vmax.f32 %v285, 0.0
      %v318 = vmax.f32 %v286, 0.0
      %v319 = vmax.f32 %v287, 0.0
      %v320 = vmax.f32 %v288, 0.0
      %v321 = vmax.f32 %v289, 0.0
      %v322 = vmax.f32 %v290, 0.0
      %v323 = vmax.f32 %v291, 0.0
      %v324 = vmax.f32 %v292, 0.0
      %v325 = vmax.f32 %v293, 0.0
      %v326 = vmax.f32 %v294, 0.0
      %v327 = vmax.f32 %v295, 0.0
      %v328 = vmax.f32 %v296, 0.0
      %v329 = vmax.f32 %v297, 0.0
      %v330 = vmax.f32 %v298, 0.0
      %v331 = vmax.f32 %v299, 0.0
      %v332 = vmax.f32 %v300, 0.0
      %v333 = vmax.f32 %v301, 0.0
      %v334 = vmax.f32 %v302, 0.0
      %v335 = vmax.f32 %v303, 0.0
      %v336 = vmax.f32 %v304, 0.0
      %p337 = scmp.eq.s32.totalorder %s19, 0
      // Predicated region
      $region33: #{unet_up_forward.4} parent=31 // pred_check
        %p338 = pneg %p337
      $region34: #{unet_up_forward.4} parent=31 // pred_check_branch
        %340 = sbr.rel (%p338) target = $region36
      $region35: #{unet_up_forward.4} parent=31 // pred_region
        %vm341 = vcmask 253952
        %342 = vst.msk [vmem:[%s194] sm:$0x1] %vm341, 0.0
      $region36: #{unet_up_forward.4} parent=31 // pred_fallthru
        _
      %v343 = vld [vmem:[%s194] sm:$0x1]
      %vm344 = vcmask 261120
      %v345 = vsel %vm344, %v305, 0.0
      %v346 = vsel %vm344, %v306, 0.0
      %v347 = vadd.f32 %v345, %v346
      %v348 = vsel %vm344, %v307, 0.0
      %v349 = vadd.f32 %v347, %v348
      %v350 = vsel %vm344, %v308, 0.0
      %v351 = vadd.f32 %v349, %v350
      %v352 = vsel %vm344, %v309, 0.0
      %v353 = vadd.f32 %v351, %v352
      %v354 = vsel %vm344, %v310, 0.0
      %v355 = vadd.f32 %v353, %v354
      %v356 = vsel %vm344, %v311, 0.0
      %v357 = vadd.f32 %v355, %v356
      %v358 = vsel %vm344, %v312, 0.0
      %v359 = vadd.f32 %v357, %v358
      %v360 = vsel %vm344, %v313, 0.0
      %v361 = vadd.f32 %v359, %v360
      %v362 = vsel %vm344, %v314, 0.0
      %v363 = vadd.f32 %v361, %v362
      %v364 = vsel %vm344, %v315, 0.0
      %v365 = vadd.f32 %v363, %v364
      %v366 = vsel %vm344, %v316, 0.0
      %v367 = vadd.f32 %v365, %v366
      %v368 = vsel %vm344, %v317, 0.0
      %v369 = vadd.f32 %v367, %v368
      %v370 = vsel %vm344, %v318, 0.0
      %v371 = vadd.f32 %v369, %v370
      %v372 = vsel %vm344, %v319, 0.0
      %v373 = vadd.f32 %v371, %v372
      %v374 = vsel %vm344, %v320, 0.0
      %v375 = vadd.f32 %v373, %v374
      %v376 = vsel %vm344, %v321, 0.0
      %v377 = vadd.f32 %v375, %v376
      %v378 = vsel %vm344, %v322, 0.0
      %v379 = vadd.f32 %v377, %v378
      %v380 = vsel %vm344, %v323, 0.0
      %v381 = vadd.f32 %v379, %v380
      %v382 = vsel %vm344, %v324, 0.0
      %v383 = vadd.f32 %v381, %v382
      %v384 = vsel %vm344, %v325, 0.0
      %v385 = vadd.f32 %v383, %v384
      %v386 = vsel %vm344, %v326, 0.0
      %v387 = vadd.f32 %v385, %v386
      %v388 = vsel %vm344, %v327, 0.0
      %v389 = vadd.f32 %v387, %v388
      %v390 = vsel %vm344, %v328, 0.0
      %v391 = vadd.f32 %v389, %v390
      %v392 = vsel %vm344, %v329, 0.0
      %v393 = vadd.f32 %v391, %v392
      %v394 = vsel %vm344, %v330, 0.0
      %v395 = vadd.f32 %v393, %v394
      %v396 = vsel %vm344, %v331, 0.0
      %v397 = vadd.f32 %v395, %v396
      %v398 = vsel %vm344, %v332, 0.0
      %v399 = vadd.f32 %v397, %v398
      %v400 = vsel %vm344, %v333, 0.0
      %v401 = vadd.f32 %v399, %v400
      %v402 = vsel %vm344, %v334, 0.0
      %v403 = vadd.f32 %v401, %v402
      %v404 = vsel %vm344, %v335, 0.0
      %v405 = vadd.f32 %v403, %v404
      %v406 = vsel %vm344, %v336, 0.0
      %v407 = vadd.f32 %v405, %v406
      %v408 = vrot.slane %v407, 4
      %v409 = vadd.f32 %v407, %v408
      %v410 = vrot.slane %v409, 2
      %v411 = vadd.f32 %v409, %v410
      %v412 = vrot.slane %v411, 1
      %v413 = vadd.f32 %v411, %v412
      %v414 = vadd.f32 %v343, %v413
      %vm415 = vcmask 253952
      %416 = vst.msk [vmem:[%s194] sm:$0x1] %vm415, %v414
      %p417 = scmp.lt.s32.totalorder %s18, 1
      %s418 = scalar_select %p417, %s18, 1
      %s419 = scalar_lea.vmem %s3, %s418
      // Predicated region
      $region37: #{unet_up_forward.4} parent=31 // pred_check
        %p420 = pneg %p114
      $region38: #{unet_up_forward.4} parent=31 // pred_check_branch
        %422 = sbr.rel (%p420) target = $region40
      $region39: #{unet_up_forward.4} parent=31 // pred_region
        _
      $region40: #{unet_up_forward.4} parent=31 // pred_fallthru
        _
    $region32: #{unet_up_forward.4} parent=5 // pred_fallthru
      _
    %p423 = scmp.le.s32.totalorder 2, %s9
    // Predicated region
    $region41: #{unet_up_forward.4} parent=5 // pred_check
      %p424 = pneg %p423
    $region42: #{unet_up_forward.4} parent=5 // pred_check_branch
      %426 = sbr.rel (%p424) target = $region44
    $region43: #{unet_up_forward.4} parent=5 // pred_region
      %s427 = ssub.s32 %s9, 2
      // Predicated region
      $region45: #{unet_up_forward.4} parent=43 // pred_check
        %p428 = pneg %p120
      $region46: #{unet_up_forward.4} parent=43 // pred_check_branch
        %430 = sbr.rel (%p428) target = $region48
      $region47: #{unet_up_forward.4} parent=43 // pred_region
        %p431 = scmp.lt.s32.totalorder %s20, 1
        %s432 = scalar_select %p431, %s20, 1
        %s433 = scalar_lea.vmem %s3, %s432
      $region48: #{unet_up_forward.4} parent=43 // pred_fallthru
        _
    $region44: #{unet_up_forward.4} parent=5 // pred_fallthru
      _
  $region6: #{unet_up_forward.4} parent=0 // loop_footer
    %s13 = sadd.s32 1, %s9
  $region7: #{unet_up_forward.4} parent=0 // loop_footer_branch
    %8 = sbr.rel target = $region3
  $region8: #{unet_up_forward.4} parent=0 // loop_exit
    _

// kernel: unet_up_forward.5
$region0: #{unet_up_forward.5}
  #allocation0 [shape = 'u32[]', space=smem, size = 0x4, offset = 0x4, fixed_abs, tag = 'smem constant byte address 0x4 - core index']
  #allocation1 [shape = 'u32[144,128]{1,0:T(1,128)}', space=vmem, size = 0x12000, scoped, tag = 'internal scratch']
  #allocation2 [shape = 'f32[1,32]{1,0:T(1,128)}', space=vmem, size = 0x200, scoped, tag = 'scratch operand']
  %s0 = inlined_call_operand.vmem [shape: f32[2,256,32], index: 0, kind: input, shape index: {}]
  %s1 = inlined_call_operand.vmem [shape: f32[1,32], index: 1, kind: input, shape index: {}]
  %s2 = inlined_call_operand.vmem [shape: f32[1,32], index: 2, kind: input, shape index: {}]
  %s3 = inlined_call_operand.vmem [shape: f32[2,1,32], index: 3, kind: input, shape index: {}]
  %s4 = inlined_call_operand.vmem [shape: f32[32,8], index: 4, kind: input, shape index: {}]
  %s5 = inlined_call_operand.vmem [shape: f32[1,8], index: 5, kind: input, shape index: {}]
  %s6 = inlined_call_operand.vmem [shape: f32[8,32], index: 6, kind: input, shape index: {}]
  %s7 = inlined_call_operand.vmem [shape: f32[1,32], index: 7, kind: input, shape index: {}]
  %s8 = inlined_call_operand.vmem [shape: f32[2,256,32], index: 8, kind: output, shape index: {}]
  %s9 = sld [smem:[#allocation0]]
  $region69: #{unet_up_forward.5} parent=0
    _
  %s11 = ssub.s32 1, %s9
  %s12 = scalar_select 0, %s11, %s9
  loop: start=0, step=1, limit=4
  $region2: #{unet_up_forward.5} parent=0 // loop_pre_header
    _
  $region3: #{unet_up_forward.5} parent=0 // loop_header
    %s14 = sphi 0, %s18
    %p15 = scmp.ge.s32.totalorder %s14, 4
    %s21 = sphi 0, %s33
    %s22 = sphi 0, %s29
    %s23 = sphi 0, %s21
    %s24 = sphi 0, %s22
    %s25 = sphi 0, %s23
    %s26 = sphi 0, %s24
    %s38 = sphi 0, %s40
    %s41 = sphi 0, %s38
    %s42 = sphi 0, %s41
    %s58 = sphi 0, %s42
    %s62 = sphi 0, %s62
    %s64 = sphi 0, %s62
    %s65 = sphi 0, %s64
    %s79 = sphi 0, %s65
    %s83 = sphi 0, %s83
    %s85 = sphi 0, %s83
    %s86 = sphi 0, %s85
    %s100 = sphi 0, %s86
    %s106 = sphi 0, %s108
    %s109 = sphi 0, %s106
    %s110 = sphi 0, %s109
    %s126 = sphi 0, %s110
    %s130 = sphi 0, %s130
    %s132 = sphi 0, %s130
    %s133 = sphi 0, %s132
    %s147 = sphi 0, %s133
    %s151 = sphi 0, %s151
    %s153 = sphi 0, %s151
    %s154 = sphi 0, %s153
    %s168 = sphi 0, %s154
    %s172 = sphi 0, %s172
    %s174 = sphi 0, %s172
    %s175 = sphi 0, %s174
    %s189 = sphi 0, %s175
    %s193 = sphi 0, %s193
    %s195 = sphi 0, %s193
    %s196 = sphi 0, %s195
    %s210 = sphi 0, %s196
    %s218 = sphi 0, %s220
    %s221 = sphi 0, %s218
    %s222 = sphi 0, %s221
    %s238 = sphi 0, %s222
  $region4: #{unet_up_forward.5} parent=0 // loop_header_branch
    %17 = sbr.rel (%p15) target = $region8
  $region5: #{unet_up_forward.5} parent=0 // loop_body
    %s19 = ssub.s32 %s14, 1
    %s20 = ssub.s32 %s14, 2
    %s27 = sadd.s32 1, %s22
    %p28 = scmp.ge.s32.totalorder %s27, 1
    %s29 = scalar_select %p28, 0, %s27
    %s30 = sadd.s32 1, %s21
    %s31 = scalar_select %p28, %s30, %s21
    %p32 = scmp.ge.s32.totalorder %s31, 2
    %s33 = scalar_select %p32, 0, %s31
    %s34 = ssub.s32 %s21, %s33
    %s35 = ssub.s32 %s22, %s29
    %s36 = sor.u32 %s34, %s35
    %p37 = scmp.eq.s32.totalorder %s36, 0
    %s39 = sadd.s32 %s38, 1
    %s40 = scalar_select %p37, %s38, %s39
    %p43 = pneg %p37
    %p44 = scmp.eq.s32.totalorder %s14, 1
    %p45 = por %p43, %p44
    %p46 = scmp.ne.s32.totalorder %s38, %s41
    %p47 = scmp.eq.s32.totalorder %s14, 0
    %p48 = por %p46, %p47
    %p49 = scmp.ne.s32.totalorder %s38, %s41
    %p50 = scmp.eq.s32.totalorder %s19, 1
    %p51 = por %p49, %p50
    %p52 = scmp.ne.s32.totalorder %s41, %s42
    %p53 = scmp.eq.s32.totalorder %s19, 0
    %p54 = por %p52, %p53
    %p55 = scmp.ne.s32.totalorder %s41, %s42
    %p56 = scmp.eq.s32.totalorder %s20, 1
    %p57 = por %p55, %p56
    %p59 = scmp.ne.s32.totalorder %s42, %s58
    %p60 = scmp.eq.s32.totalorder %s20, 0
    %p61 = por %p59, %p60
    %s63 = sadd.s32 %s62, 1
    %p66 = scmp.eq.s32.totalorder %s14, 1
    %p67 = scmp.ne.s32.totalorder %s62, %s64
    %p68 = scmp.eq.s32.totalorder %s14, 0
    %p69 = por %p67, %p68
    %p70 = scmp.ne.s32.totalorder %s62, %s64
    %p71 = scmp.eq.s32.totalorder %s19, 1
    %p72 = por %p70, %p71
    %p73 = scmp.ne.s32.totalorder %s64, %s65
    %p74 = scmp.eq.s32.totalorder %s19, 0
    %p75 = por %p73, %p74
    %p76 = scmp.ne.s32.totalorder %s64, %s65
    %p77 = scmp.eq.s32.totalorder %s20, 1
    %p78 = por %p76, %p77
    %p80 = scmp.ne.s32.totalorder %s65, %s79
    %p81 = scmp.eq.s32.totalorder %s20, 0
    %p82 = por %p80, %p81
    %s84 = sadd.s32 %s83, 1
    %p87 = scmp.eq.s32.totalorder %s14, 1
    %p88 = scmp.ne.s32.totalorder %s83, %s85
    %p89 = scmp.eq.s32.totalorder %s14, 0
    %p90 = por %p88, %p89
    %p91 = scmp.ne.s32.totalorder %s83, %s85
    %p92 = scmp.eq.s32.totalorder %s19, 1
    %p93 = por %p91, %p92
    %p94 = scmp.ne.s32.totalorder %s85, %s86
    %p95 = scmp.eq.s32.totalorder %s19, 0
    %p96 = por %p94, %p95
    %p97 = scmp.ne.s32.totalorder %s85, %s86
    %p98 = scmp.eq.s32.totalorder %s20, 1
    %p99 = por %p97, %p98
    %p101 = scmp.ne.s32.totalorder %s86, %s100
    %p102 = scmp.eq.s32.totalorder %s20, 0
    %p103 = por %p101, %p102
    %s104 = ssub.s32 %s21, %s33
    %p105 = scmp.eq.s32.totalorder %s104, 0
    %s107 = sadd.s32 %s106, 1
    %s108 = scalar_select %p105, %s106, %s107
    %p111 = pneg %p105
    %p112 = scmp.eq.s32.totalorder %s14, 1
    %p113 = por %p111, %p112
    %p114 = scmp.ne.s32.totalorder %s106, %s109
    %p115 = scmp.eq.s32.totalorder %s14, 0
    %p116 = por %p114, %p115
    %p117 = scmp.ne.s32.totalorder %s106, %s109
    %p118 = scmp.eq.s32.totalorder %s19, 1
    %p119 = por %p117, %p118
    %p120 = scmp.ne.s32.totalorder %s109, %s110
    %p121 = scmp.eq.s32.totalorder %s19, 0
    %p122 = por %p120, %p121
    %p123 = scmp.ne.s32.totalorder %s109, %s110
    %p124 = scmp.eq.s32.totalorder %s20, 1
    %p125 = por %p123, %p124
    %p127 = scmp.ne.s32.totalorder %s110, %s126
    %p128 = scmp.eq.s32.totalorder %s20, 0
    %p129 = por %p127, %p128
    %s131 = sadd.s32 %s130, 1
    %p134 = scmp.eq.s32.totalorder %s14, 1
    %p135 = scmp.ne.s32.totalorder %s130, %s132
    %p136 = scmp.eq.s32.totalorder %s14, 0
    %p137 = por %p135, %p136
    %p138 = scmp.ne.s32.totalorder %s130, %s132
    %p139 = scmp.eq.s32.totalorder %s19, 1
    %p140 = por %p138, %p139
    %p141 = scmp.ne.s32.totalorder %s132, %s133
    %p142 = scmp.eq.s32.totalorder %s19, 0
    %p143 = por %p141, %p142
    %p144 = scmp.ne.s32.totalorder %s132, %s133
    %p145 = scmp.eq.s32.totalorder %s20, 1
    %p146 = por %p144, %p145
    %p148 = scmp.ne.s32.totalorder %s133, %s147
    %p149 = scmp.eq.s32.totalorder %s20, 0
    %p150 = por %p148, %p149
    %s152 = sadd.s32 %s151, 1
    %p155 = scmp.eq.s32.totalorder %s14, 1
    %p156 = scmp.ne.s32.totalorder %s151, %s153
    %p157 = scmp.eq.s32.totalorder %s14, 0
    %p158 = por %p156, %p157
    %p159 = scmp.ne.s32.totalorder %s151, %s153
    %p160 = scmp.eq.s32.totalorder %s19, 1
    %p161 = por %p159, %p160
    %p162 = scmp.ne.s32.totalorder %s153, %s154
    %p163 = scmp.eq.s32.totalorder %s19, 0
    %p164 = por %p162, %p163
    %p165 = scmp.ne.s32.totalorder %s153, %s154
    %p166 = scmp.eq.s32.totalorder %s20, 1
    %p167 = por %p165, %p166
    %p169 = scmp.ne.s32.totalorder %s154, %s168
    %p170 = scmp.eq.s32.totalorder %s20, 0
    %p171 = por %p169, %p170
    %s173 = sadd.s32 %s172, 1
    %p176 = scmp.eq.s32.totalorder %s14, 1
    %p177 = scmp.ne.s32.totalorder %s172, %s174
    %p178 = scmp.eq.s32.totalorder %s14, 0
    %p179 = por %p177, %p178
    %p180 = scmp.ne.s32.totalorder %s172, %s174
    %p181 = scmp.eq.s32.totalorder %s19, 1
    %p182 = por %p180, %p181
    %p183 = scmp.ne.s32.totalorder %s174, %s175
    %p184 = scmp.eq.s32.totalorder %s19, 0
    %p185 = por %p183, %p184
    %p186 = scmp.ne.s32.totalorder %s174, %s175
    %p187 = scmp.eq.s32.totalorder %s20, 1
    %p188 = por %p186, %p187
    %p190 = scmp.ne.s32.totalorder %s175, %s189
    %p191 = scmp.eq.s32.totalorder %s20, 0
    %p192 = por %p190, %p191
    %s194 = sadd.s32 %s193, 1
    %p197 = scmp.eq.s32.totalorder %s14, 1
    %p198 = scmp.ne.s32.totalorder %s193, %s195
    %p199 = scmp.eq.s32.totalorder %s14, 0
    %p200 = por %p198, %p199
    %p201 = scmp.ne.s32.totalorder %s193, %s195
    %p202 = scmp.eq.s32.totalorder %s19, 1
    %p203 = por %p201, %p202
    %p204 = scmp.ne.s32.totalorder %s195, %s196
    %p205 = scmp.eq.s32.totalorder %s19, 0
    %p206 = por %p204, %p205
    %p207 = scmp.ne.s32.totalorder %s195, %s196
    %p208 = scmp.eq.s32.totalorder %s20, 1
    %p209 = por %p207, %p208
    %p211 = scmp.ne.s32.totalorder %s196, %s210
    %p212 = scmp.eq.s32.totalorder %s20, 0
    %p213 = por %p211, %p212
    %s214 = ssub.s32 %s21, %s33
    %s215 = ssub.s32 %s22, %s29
    %s216 = sor.u32 %s214, %s215
    %p217 = scmp.eq.s32.totalorder %s216, 0
    %s219 = sadd.s32 %s218, 1
    %s220 = scalar_select %p217, %s218, %s219
    %p223 = pneg %p217
    %p224 = scmp.eq.s32.totalorder %s14, 1
    %p225 = por %p223, %p224
    %p226 = scmp.ne.s32.totalorder %s218, %s221
    %p227 = scmp.eq.s32.totalorder %s14, 0
    %p228 = por %p226, %p227
    %p229 = scmp.ne.s32.totalorder %s218, %s221
    %p230 = scmp.eq.s32.totalorder %s19, 1
    %p231 = por %p229, %p230
    %p232 = scmp.ne.s32.totalorder %s221, %s222
    %p233 = scmp.eq.s32.totalorder %s19, 0
    %p234 = por %p232, %p233
    %p235 = scmp.ne.s32.totalorder %s221, %s222
    %p236 = scmp.eq.s32.totalorder %s20, 1
    %p237 = por %p235, %p236
    %p239 = scmp.ne.s32.totalorder %s222, %s238
    %p240 = scmp.eq.s32.totalorder %s20, 0
    %p241 = por %p239, %p240
    %p242 = scmp.le.s32.totalorder 1, %s14
    %p243 = scmp.lt.s32.totalorder %s14, 3
    %p244 = pnand %p242, %p243
    %p245 = pneg %p244
    // Predicated region
    $region9: #{unet_up_forward.5} parent=5 // pred_check
      _
    $region10: #{unet_up_forward.5} parent=5 // pred_check_branch
      %247 = sbr.rel (%p244) target = $region12
    $region11: #{unet_up_forward.5} parent=5 // pred_region
      %s248 = ssub.s32 %s14, 1
      // Predicated region
      $region13: #{unet_up_forward.5} parent=11 // pred_check
        %p249 = pneg %p75
      $region14: #{unet_up_forward.5} parent=11 // pred_check_branch
        %251 = sbr.rel (%p249) target = $region16
      $region15: #{unet_up_forward.5} parent=11 // pred_region
        _
      $region16: #{unet_up_forward.5} parent=11 // pred_fallthru
        _
      // Predicated region
      $region17: #{unet_up_forward.5} parent=11 // pred_check
        %p252 = pneg %p96
      $region18: #{unet_up_forward.5} parent=11 // pred_check_branch
        %254 = sbr.rel (%p252) target = $region20
      $region19: #{unet_up_forward.5} parent=11 // pred_region
        _
      $region20: #{unet_up_forward.5} parent=11 // pred_fallthru
        _
      // Predicated region
      $region21: #{unet_up_forward.5} parent=11 // pred_check
        %p255 = pneg %p143
      $region22: #{unet_up_forward.5} parent=11 // pred_check_branch
        %257 = sbr.rel (%p255) target = $region24
      $region23: #{unet_up_forward.5} parent=11 // pred_region
        _
      $region24: #{unet_up_forward.5} parent=11 // pred_fallthru
        _
      // Predicated region
      $region25: #{unet_up_forward.5} parent=11 // pred_check
        %p258 = pneg %p164
      $region26: #{unet_up_forward.5} parent=11 // pred_check_branch
        %260 = sbr.rel (%p258) target = $region28
      $region27: #{unet_up_forward.5} parent=11 // pred_region
        _
      $region28: #{unet_up_forward.5} parent=11 // pred_fallthru
        _
      // Predicated region
      $region29: #{unet_up_forward.5} parent=11 // pred_check
        %p261 = pneg %p185
      $region30: #{unet_up_forward.5} parent=11 // pred_check_branch
        %263 = sbr.rel (%p261) target = $region32
      $region31: #{unet_up_forward.5} parent=11 // pred_region
        _
      $region32: #{unet_up_forward.5} parent=11 // pred_fallthru
        _
      // Predicated region
      $region33: #{unet_up_forward.5} parent=11 // pred_check
        %p264 = pneg %p206
      $region34: #{unet_up_forward.5} parent=11 // pred_check_branch
        %266 = sbr.rel (%p264) target = $region36
      $region35: #{unet_up_forward.5} parent=11 // pred_region
        _
      $region36: #{unet_up_forward.5} parent=11 // pred_fallthru
        _
    $region12: #{unet_up_forward.5} parent=5 // pred_fallthru
      _
    %p267 = scmp.lt.s32.totalorder %s14, 2
    // Predicated region
    $region37: #{unet_up_forward.5} parent=5 // pred_check
      %p268 = pneg %p267
    $region38: #{unet_up_forward.5} parent=5 // pred_check_branch
      %270 = sbr.rel (%p268) target = $region40
    $region39: #{unet_up_forward.5} parent=5 // pred_region
      // Predicated region
      $region41: #{unet_up_forward.5} parent=39 // pred_check
        %p271 = pneg %p48
      $region42: #{unet_up_forward.5} parent=39 // pred_check_branch
        %273 = sbr.rel (%p271) target = $region44
      $region43: #{unet_up_forward.5} parent=39 // pred_region
        %s274 = smul.u32 32, %s22
        %p275 = scmp.lt.s32.totalorder %s21, 1
        %s276 = scalar_select %p275, %s21, 1
        %p277 = scmp.lt.s32.totalorder %s274, 31
        %s278 = scalar_select %p277, %s274, 31
        %s279 = smul.addr %s276, 32
        %s280 = sadd.s32 %s278, %s279
        %s281 = smul.addr %s280, 8
        %s282 = scalar_lea.vmem %s0, %s281
        %s283 = smul.u32 32, %s22
      $region44: #{unet_up_forward.5} parent=39 // pred_fallthru
        _
      // Predicated region
      $region45: #{unet_up_forward.5} parent=39 // pred_check
        %p284 = pneg %p116
      $region46: #{unet_up_forward.5} parent=39 // pred_check_branch
        %286 = sbr.rel (%p284) target = $region48
      $region47: #{unet_up_forward.5} parent=39 // pred_region
        %p287 = scmp.lt.s32.totalorder %s21, 1
        %s288 = scalar_select %p287, %s21, 1
        %s289 = scalar_lea.vmem %s3, %s288
      $region48: #{unet_up_forward.5} parent=39 // pred_fallthru
        _
    $region40: #{unet_up_forward.5} parent=5 // pred_fallthru
      _
    %p290 = scmp.le.s32.totalorder 1, %s14
    %p291 = scmp.lt.s32.totalorder %s14, 3
    %p292 = pnand %p290, %p291
    %p293 = pneg %p292
    // Predicated region
    $region49: #{unet_up_forward.5} parent=5 // pred_check
      _
    $region50: #{unet_up_forward.5} parent=5 // pred_check_branch
      %295 = sbr.rel (%p292) target = $region52
    $region51: #{unet_up_forward.5} parent=5 // pred_region
      %s296 = ssub.s32 %s14, 1
      %s297 = smul.u32 32, %s24
      %p298 = scmp.lt.s32.totalorder %s23, 1
      %s299 = scalar_select %p298, %s23, 1
      %p300 = scmp.lt.s32.totalorder %s297, 31
      %s301 = scalar_select %p300, %s297, 31
      %s302 = smul.addr %s299, 32
      %s303 = sadd.s32 %s301, %s302
      %s304 = smul.addr %s303, 8
      %s305 = scalar_lea.vmem %s0, %s304
      %p306 = pneg %p54
      %p307 = pneg %p51
      %p308 = pneg %p75
      %p309 = pneg %p72
      %p310 = pneg %p96
      %p311 = pneg %p93
      %p312 = scmp.lt.s32.totalorder %s23, 1
      %s313 = scalar_select %p312, %s23, 1
      %s314 = scalar_lea.vmem %s3, %s313
      %p315 = pneg %p122
      %p316 = pneg %p119
      %p317 = pneg %p143
      %p318 = pneg %p140
      %p319 = pneg %p164
      %p320 = pneg %p161
      %p321 = pneg %p185
      %p322 = pneg %p182
      %p323 = pneg %p206
      %p324 = pneg %p203
      %p325 = pneg %p234
      %p326 = pneg %p231
      %s327 = smul.u32 32, %s24
      %p328 = scmp.lt.s32.totalorder %s23, 1
      %s329 = scalar_select %p328, %s23, 1
      %p330 = scmp.lt.s32.totalorder %s327, 31
      %s331 = scalar_select %p330, %s327, 31
      %s332 = smul.addr %s329, 32
      %s333 = sadd.s32 %s331, %s332
      %s334 = smul.addr %s333, 8
      %s335 = scalar_lea.vmem %s8, %s334
      %s336 = smul.u32 32, %s24
      %p337 = scmp.lt.s32.totalorder %s23, 1
      %s338 = scalar_select %p337, %s23, 1
      %p339 = scmp.lt.s32.totalorder %s336, 31
      %s340 = scalar_select %p339, %s336, 31
      %s341 = smul.addr %s338, 32
      %s342 = sadd.s32 %s340, %s341
      %s343 = smul.addr %s342, 8
      %s344 = scalar_lea.vmem %s0, %s343
      %s345 = smul.u32 32, %s24
      %p346 = scmp.lt.s32.totalorder %s23, 1
      %s347 = scalar_select %p346, %s23, 1
      %s348 = scalar_lea.vmem %s3, %s347
      %s349 = smul.u32 32, %s24
      %p350 = scmp.lt.s32.totalorder %s23, 1
      %s351 = scalar_select %p350, %s23, 1
      %p352 = scmp.lt.s32.totalorder %s349, 31
      %s353 = scalar_select %p352, %s349, 31
      %s354 = smul.addr %s351, 32
      %s355 = sadd.s32 %s353, %s354
      %s356 = smul.addr %s355, 8
      %s357 = scalar_lea.vmem %s8, %s356
      %s358 = smul.u32 32, %s24
      %p359 = scmp.eq.s32.totalorder %s24, 0
      // Predicated region
      $region53: #{unet_up_forward.5} parent=51 // pred_check
        %p360 = pneg %p359
      $region54: #{unet_up_forward.5} parent=51 // pred_check_branch
        %362 = sbr.rel (%p360) target = $region56
      $region55: #{unet_up_forward.5} parent=51 // pred_region
        %v363 = vld [vmem:[%s348] sm:$0x1]
        %v364 = vld [vmem:[%s4] sm:$0xff]
        %v365 = vld [vmem:[%s4 + $0x8] sm:$0xff]
        %v366 = vld [vmem:[%s4 + $0x10] sm:$0xff]
        %v367 = vld [vmem:[%s4 + $0x18] sm:$0xff]
        %v368 = vld [vmem:[%s5] sm:$0x1]
        %vm369 = vcmask 261120
        %v371 = vsel %vm369, %v363, 0
        %373 = vmatprep.subr.mxu0 0.0
        %374 = vmatpush1.msra.mxu0 %v364
        %375 = vmatprep.subr.mxu0 0.0
        %376 = vmatpush1.msra.mxu0 %v365
        %377 = vmatprep.subr.mxu0 0.0
        %378 = vmatpush1.msra.mxu0 %v366
        %379 = vmatprep.subr.mxu0 0.0
        %380 = vmatpush1.msra.mxu0 %v367
        %381 = vmatprep.subr.mxu0 0.0
        %382 = vmatpush1.msra.mxu0 0.0
        %383 = vmatprep.subr.mxu0 0.0
        %384 = vmatpush1.msra.mxu0 0.0
        %385 = vmatprep.subr.mxu0 0.0
        %386 = vmatpush1.msra.mxu0 0.0
        %387 = vmatprep.subr.mxu0 0.0
        %388 = vmatpush1.msra.mxu0 0.0
        %389 = vmatprep.subr.mxu0 0.0
        %390 = vmatpush1.msra.mxu0 0.0
        %391 = vmatprep.subr.mxu0 0.0
        %392 = vmatpush1.msra.mxu0 0.0
        %393 = vmatprep.subr.mxu0 0.0
        %394 = vmatpush1.msra.mxu0 0.0
        %395 = vmatprep.subr.mxu0 0.0
        %396 = vmatpush1.msra.mxu0 0.0
        %397 = vmatprep.subr.mxu0 0.0
        %398 = vmatpush1.msra.mxu0 0.0
        %399 = vmatprep.subr.mxu0 0.0
        %400 = vmatpush1.msra.mxu0 0.0
        %401 = vmatprep.subr.mxu0 0.0
        %402 = vmatpush1.msra.mxu0 0.0
        %403 = vmatprep.subr.mxu0 0.0
        %404 = vmatpush1.msra.mxu0 0.0
        %405 = vmatprep.subr.mxu0 0.0
        %406 = vmatpush1.msra.mxu0 0.0
        %407 = vmatprep.subr.mxu0 0.0
        %408 = vmatpush1.msra.mxu0 0.0
        %409 = vmatprep.subr.mxu0 0.0
        %410 = vmatpush1.msra.mxu0 0.0
        %411 = vmatprep.subr.mxu0 0.0
        %412 = vmatpush1.msra.mxu0 0.0
        %413 = vmatprep.subr.mxu0 0.0
        %414 = vmatpush1.msra.mxu0 0.0
        %415 = vmatprep.subr.mxu0 0.0
        %416 = vmatpush1.msra.mxu0 0.0
        %417 = vmatprep.subr.mxu0 0.0
        %418 = vmatpush1.msra.mxu0 0.0
        %419 = vmatprep.subr.mxu0 0.0
        %420 = vmatpush1.msra.mxu0 0.0
        %421 = vmatprep.subr.mxu0 0.0
        %422 = vmatpush1.msra.mxu0 0.0
        %423 = vmatprep.subr.mxu0 0.0
        %424 = vmatpush1.msra.mxu0 0.0
        %425 = vmatprep.subr.mxu0 0.0
        %426 = vmatpush1.msra.mxu0 0.0
        %427 = vmatprep.subr.mxu0 0.0
        %428 = vmatpush1.msra.mxu0 0.0
        %429 = vmatprep.subr.mxu0 0.0
        %430 = vmatpush1.msra.mxu0 0.0
        %431 = vmatprep.subr.mxu0 0.0
        %432 = vmatpush1.msra.mxu0 0.0
        %433 = vmatprep.subr.mxu0 0.0
        %434 = vmatpush1.msra.mxu0 0.0
        %435 = vmatprep.subr.mxu0 0.0
        %436 = vmatpush1.msra.mxu0 0.0
        %437 = vmatprep.mubr.f32.mxu0 0.0
        %438 = vmatmul.mubr.f32.gmra.mrb[0].mxu0 %v371
        %v439 = vpop.f32.mrb[0].mxu0
        %v440 = vadd.f32 %v368, %v439
        %v441 = vpop.f32.mrb[0].mxu0
        %442 = vdwg.mxu0
        %v443 = vmax.f32 %v440, 0.0
        %v444 = vld [vmem:[%s6] sm:$0xff]
        %v445 = vld [vmem:[%s7] sm:$0x1]
        %vm446 = vcmask 64512
        %v448 = vsel %vm446, %v443, 0
        %450 = vmatprep.subr.mxu0 0.0
        %451 = vmatpush1.msra.mxu0 %v444
        %452 = vmatprep.subr.mxu0 0.0
        %453 = vmatpush1.msra.mxu0 0.0
        %454 = vmatprep.subr.mxu0 0.0
        %455 = vmatpush1.msra.mxu0 0.0
        %456 = vmatprep.subr.mxu0 0.0
        %457 = vmatpush1.msra.mxu0 0.0
        %458 = vmatprep.subr.mxu0 0.0
        %459 = vmatpush1.msra.mxu0 0.0
        %460 = vmatprep.subr.mxu0 0.0
        %461 = vmatpush1.msra.mxu0 0.0
        %462 = vmatprep.subr.mxu0 0.0
        %463 = vmatpush1.msra.mxu0 0.0
        %464 = vmatprep.subr.mxu0 0.0
        %465 = vmatpush1.msra.mxu0 0.0
        %466 = vmatprep.subr.mxu0 0.0
        %467 = vmatpush1.msra.mxu0 0.0
        %468 = vmatprep.subr.mxu0 0.0
        %469 = vmatpush1.msra.mxu0 0.0
        %470 = vmatprep.subr.mxu0 0.0
        %471 = vmatpush1.msra.mxu0 0.0
        %472 = vmatprep.subr.mxu0 0.0
        %473 = vmatpush1.msra.mxu0 0.0
        %474 = vmatprep.subr.mxu0 0.0
        %475 = vmatpush1.msra.mxu0 0.0
        %476 = vmatprep.subr.mxu0 0.0
        %477 = vmatpush1.msra.mxu0 0.0
        %478 = vmatprep.subr.mxu0 0.0
        %479 = vmatpush1.msra.mxu0 0.0
        %480 = vmatprep.subr.mxu0 0.0
        %481 = vmatpush1.msra.mxu0 0.0
        %482 = vmatprep.subr.mxu0 0.0
        %483 = vmatpush1.msra.mxu0 0.0
        %484 = vmatprep.subr.mxu0 0.0
        %485 = vmatpush1.msra.mxu0 0.0
        %486 = vmatprep.subr.mxu0 0.0
        %487 = vmatpush1.msra.mxu0 0.0
        %488 = vmatprep.subr.mxu0 0.0
        %489 = vmatpush1.msra.mxu0 0.0
        %490 = vmatprep.subr.mxu0 0.0
        %491 = vmatpush1.msra.mxu0 0.0
        %492 = vmatprep.subr.mxu0 0.0
        %493 = vmatpush1.msra.mxu0 0.0
        %494 = vmatprep.subr.mxu0 0.0
        %495 = vmatpush1.msra.mxu0 0.0
        %496 = vmatprep.subr.mxu0 0.0
        %497 = vmatpush1.msra.mxu0 0.0
        %498 = vmatprep.subr.mxu0 0.0
        %499 = vmatpush1.msra.mxu0 0.0
        %500 = vmatprep.subr.mxu0 0.0
        %501 = vmatpush1.msra.mxu0 0.0
        %502 = vmatprep.subr.mxu0 0.0
        %503 = vmatpush1.msra.mxu0 0.0
        %504 = vmatprep.subr.mxu0 0.0
        %505 = vmatpush1.msra.mxu0 0.0
        %506 = vmatprep.subr.mxu0 0.0
        %507 = vmatpush1.msra.mxu0 0.0
        %508 = vmatprep.subr.mxu0 0.0
        %509 = vmatpush1.msra.mxu0 0.0
        %510 = vmatprep.subr.mxu0 0.0
        %511 = vmatpush1.msra.mxu0 0.0
        %512 = vmatprep.subr.mxu0 0.0
        %513 = vmatpush1.msra.mxu0 0.0
        %514 = vmatprep.mubr.f32.mxu0 0.0
        %515 = vmatmul.mubr.f32.gmra.mrb[0].mxu0 %v448
        %v516 = vpop.f32.mrb[0].mxu0
        %v517 = vadd.f32 %v445, %v516
        %v518 = vpop.f32.mrb[0].mxu0
        %519 = vdwg.mxu0
        %v520 = vmul.f32 %v517, 0.16666667
        %v521 = vadd.f32 %v520, 0.5
        %v522 = vmax.f32 %v521, 0.0
        %v523 = vmin.f32 %v522, 1.0
        %vm524 = vcmask 253952
        %525 = vst.msk [vmem:[#allocation2] sm:$0x1] %vm524, %v523
      $region56: #{unet_up_forward.5} parent=51 // pred_fallthru
        _
      %v526 = vld [vmem:[%s344] sm:$0xff]
      %v527 = vld [vmem:[%s344 + $0x8] sm:$0xff]
      %v528 = vld [vmem:[%s344 + $0x10] sm:$0xff]
      %v529 = vld [vmem:[%s344 + $0x18] sm:$0xff]
      %v530 = vld [vmem:[%s344 + $0x20] sm:$0xff]
      %v531 = vld [vmem:[%s344 + $0x28] sm:$0xff]
      %v532 = vld [vmem:[%s344 + $0x30] sm:$0xff]
      %v533 = vld [vmem:[%s344 + $0x38] sm:$0xff]
      %v534 = vld [vmem:[%s344 + $0x40] sm:$0xff]
      %v535 = vld [vmem:[%s344 + $0x48] sm:$0xff]
      %v536 = vld [vmem:[%s344 + $0x50] sm:$0xff]
      %v537 = vld [vmem:[%s344 + $0x58] sm:$0xff]
      %v538 = vld [vmem:[%s344 + $0x60] sm:$0xff]
      %v539 = vld [vmem:[%s344 + $0x68] sm:$0xff]
      %v540 = vld [vmem:[%s344 + $0x70] sm:$0xff]
      %v541 = vld [vmem:[%s344 + $0x78] sm:$0xff]
      %v542 = vld [vmem:[%s344 + $0x80] sm:$0xff]
      %v543 = vld [vmem:[%s344 + $0x88] sm:$0xff]
      %v544 = vld [vmem:[%s344 + $0x90] sm:$0xff]
      %v545 = vld [vmem:[%s344 + $0x98] sm:$0xff]
      %v546 = vld [vmem:[%s344 + $0xa0] sm:$0xff]
      %v547 = vld [vmem:[%s344 + $0xa8] sm:$0xff]
      %v548 = vld [vmem:[%s344 + $0xb0] sm:$0xff]
      %v549 = vld [vmem:[%s344 + $0xb8] sm:$0xff]
      %v550 = vld [vmem:[%s344 + $0xc0] sm:$0xff]
      %v551 = vld [vmem:[%s344 + $0xc8] sm:$0xff]
      %v552 = vld [vmem:[%s344 + $0xd0] sm:$0xff]
      %v553 = vld [vmem:[%s344 + $0xd8] sm:$0xff]
      %v554 = vld [vmem:[%s344 + $0xe0] sm:$0xff]
      %v555 = vld [vmem:[%s344 + $0xe8] sm:$0xff]
      %v556 = vld [vmem:[%s344 + $0xf0] sm:$0xff]
      %v557 = vld [vmem:[%s344 + $0xf8] sm:$0xff]
      %v558 = vld [vmem:[%s1] sm:$0x1]
      %v560 = vlaneseq
      %v561 = vshrl.u32 %v560, 7
      %v562 = vsub.s32 0, %v561
      %v563 = vrot.slane %v558, %v562
      %v565 = vmul.f32 %v526, %v563
      %v566 = vmul.f32 %v527, %v563
      %v567 = vmul.f32 %v528, %v563
      %v568 = vmul.f32 %v529, %v563
      %v569 = vmul.f32 %v530, %v563
      %v570 = vmul.f32 %v531, %v563
      %v571 = vmul.f32 %v532, %v563
      %v572 = vmul.f32 %v533, %v563
      %v573 = vmul.f32 %v534, %v563
      %v574 = vmul.f32 %v535, %v563
      %v575 = vmul.f32 %v536, %v563
      %v576 = vmul.f32 %v537, %v563
      %v577 = vmul.f32 %v538, %v563
      %v578 = vmul.f32 %v539, %v563
      %v579 = vmul.f32 %v540, %v563
      %v580 = vmul.f32 %v541, %v563
      %v581 = vmul.f32 %v542, %v563
      %v582 = vmul.f32 %v543, %v563
      %v583 = vmul.f32 %v544, %v563
      %v584 = vmul.f32 %v545, %v563
      %v585 = vmul.f32 %v546, %v563
      %v586 = vmul.f32 %v547, %v563
      %v587 = vmul.f32 %v548, %v563
      %v588 = vmul.f32 %v549, %v563
      %v589 = vmul.f32 %v550, %v563
      %v590 = vmul.f32 %v551, %v563
      %v591 = vmul.f32 %v552, %v563
      %v592 = vmul.f32 %v553, %v563
      %v593 = vmul.f32 %v554, %v563
      %v594 = vmul.f32 %v555, %v563
      %v595 = vmul.f32 %v556, %v563
      %v596 = vmul.f32 %v557, %v563
      %v597 = vld [vmem:[%s2] sm:$0x1]
      %v599 = vlaneseq
      %v600 = vshrl.u32 %v599, 7
      %v601 = vsub.s32 0, %v600
      %v602 = vrot.slane %v597, %v601
      %v604 = vadd.f32 %v565, %v602
      %v605 = vadd.f32 %v566, %v602
      %v606 = vadd.f32 %v567, %v602
      %v607 = vadd.f32 %v568, %v602
      %v608 = vadd.f32 %v569, %v602
      %v609 = vadd.f32 %v570, %v602
      %v610 = vadd.f32 %v571, %v602
      %v611 = vadd.f32 %v572, %v602
      %v612 = vadd.f32 %v573, %v602
      %v613 = vadd.f32 %v574, %v602
      %v614 = vadd.f32 %v575, %v602
      %v615 = vadd.f32 %v576, %v602
      %v616 = vadd.f32 %v577, %v602
      %v617 = vadd.f32 %v578, %v602
      %v618 = vadd.f32 %v579, %v602
      %v619 = vadd.f32 %v580, %v602
      %v620 = vadd.f32 %v581, %v602
      %v621 = vadd.f32 %v582, %v602
      %v622 = vadd.f32 %v583, %v602
      %v623 = vadd.f32 %v584, %v602
      %v624 = vadd.f32 %v585, %v602
      %v625 = vadd.f32 %v586, %v602
      %v626 = vadd.f32 %v587, %v602
      %v627 = vadd.f32 %v588, %v602
      %v628 = vadd.f32 %v589, %v602
      %v629 = vadd.f32 %v590, %v602
      %v630 = vadd.f32 %v591, %v602
      %v631 = vadd.f32 %v592, %v602
      %v632 = vadd.f32 %v593, %v602
      %v633 = vadd.f32 %v594, %v602
      %v634 = vadd.f32 %v595, %v602
      %v635 = vadd.f32 %v596, %v602
      %v636 = vmax.f32 %v604, 0.0
      %v637 = vmax.f32 %v605, 0.0
      %v638 = vmax.f32 %v606, 0.0
      %v639 = vmax.f32 %v607, 0.0
      %v640 = vmax.f32 %v608, 0.0
      %v641 = vmax.f32 %v609, 0.0
      %v642 = vmax.f32 %v610, 0.0
      %v643 = vmax.f32 %v611, 0.0
      %v644 = vmax.f32 %v612, 0.0
      %v645 = vmax.f32 %v613, 0.0
      %v646 = vmax.f32 %v614, 0.0
      %v647 = vmax.f32 %v615, 0.0
      %v648 = vmax.f32 %v616, 0.0
      %v649 = vmax.f32 %v617, 0.0
      %v650 = vmax.f32 %v618, 0.0
      %v651 = vmax.f32 %v619, 0.0
      %v652 = vmax.f32 %v620, 0.0
      %v653 = vmax.f32 %v621, 0.0
      %v654 = vmax.f32 %v622, 0.0
      %v655 = vmax.f32 %v623, 0.0
      %v656 = vmax.f32 %v624, 0.0
      %v657 = vmax.f32 %v625, 0.0
      %v658 = vmax.f32 %v626, 0.0
      %v659 = vmax.f32 %v627, 0.0
      %v660 = vmax.f32 %v628, 0.0
      %v661 = vmax.f32 %v629, 0.0
      %v662 = vmax.f32 %v630, 0.0
      %v663 = vmax.f32 %v631, 0.0
      %v664 = vmax.f32 %v632, 0.0
      %v665 = vmax.f32 %v633, 0.0
      %v666 = vmax.f32 %v634, 0.0
      %v667 = vmax.f32 %v635, 0.0
      %v668 = vld [vmem:[#allocation2] sm:$0x1]
      %v670 = vlaneseq
      %v671 = vshrl.u32 %v670, 7
      %v672 = vsub.s32 0, %v671
      %v673 = vrot.slane %v668, %v672
      %v675 = vmul.f32 %v636, %v673
      %v676 = vmul.f32 %v637, %v673
      %v677 = vmul.f32 %v638, %v673
      %v678 = vmul.f32 %v639, %v673
      %v679 = vmul.f32 %v640, %v673
      %v680 = vmul.f32 %v641, %v673
      %v681 = vmul.f32 %v642, %v673
      %v682 = vmul.f32 %v643, %v673
      %v683 = vmul.f32 %v644, %v673
      %v684 = vmul.f32 %v645, %v673
      %v685 = vmul.f32 %v646, %v673
      %v686 = vmul.f32 %v647, %v673
      %v687 = vmul.f32 %v648, %v673
      %v688 = vmul.f32 %v649, %v673
      %v689 = vmul.f32 %v650, %v673
      %v690 = vmul.f32 %v651, %v673
      %v691 = vmul.f32 %v652, %v673
      %v692 = vmul.f32 %v653, %v673
      %v693 = vmul.f32 %v654, %v673
      %v694 = vmul.f32 %v655, %v673
      %v695 = vmul.f32 %v656, %v673
      %v696 = vmul.f32 %v657, %v673
      %v697 = vmul.f32 %v658, %v673
      %v698 = vmul.f32 %v659, %v673
      %v699 = vmul.f32 %v660, %v673
      %v700 = vmul.f32 %v661, %v673
      %v701 = vmul.f32 %v662, %v673
      %v702 = vmul.f32 %v663, %v673
      %v703 = vmul.f32 %v664, %v673
      %v704 = vmul.f32 %v665, %v673
      %v705 = vmul.f32 %v666, %v673
      %v706 = vmul.f32 %v667, %v673
      %vm707 = vcmask 261120
      %708 = vst.msk [vmem:[%s357] sm:$0xff] %vm707, %v675
      %709 = vst.msk [vmem:[%s357 + $0x8] sm:$0xff] %vm707, %v676
      %710 = vst.msk [vmem:[%s357 + $0x10] sm:$0xff] %vm707, %v677
      %711 = vst.msk [vmem:[%s357 + $0x18] sm:$0xff] %vm707, %v678
      %712 = vst.msk [vmem:[%s357 + $0x20] sm:$0xff] %vm707, %v679
      %713 = vst.msk [vmem:[%s357 + $0x28] sm:$0xff] %vm707, %v680
      %714 = vst.msk [vmem:[%s357 + $0x30] sm:$0xff] %vm707, %v681
      %715 = vst.msk [vmem:[%s357 + $0x38] sm:$0xff] %vm707, %v682
      %716 = vst.msk [vmem:[%s357 + $0x40] sm:$0xff] %vm707, %v683
      %717 = vst.msk [vmem:[%s357 + $0x48] sm:$0xff] %vm707, %v684
      %718 = vst.msk [vmem:[%s357 + $0x50] sm:$0xff] %vm707, %v685
      %719 = vst.msk [vmem:[%s357 + $0x58] sm:$0xff] %vm707, %v686
      %720 = vst.msk [vmem:[%s357 + $0x60] sm:$0xff] %vm707, %v687
      %721 = vst.msk [vmem:[%s357 + $0x68] sm:$0xff] %vm707, %v688
      %722 = vst.msk [vmem:[%s357 + $0x70] sm:$0xff] %vm707, %v689
      %723 = vst.msk [vmem:[%s357 + $0x78] sm:$0xff] %vm707, %v690
      %724 = vst.msk [vmem:[%s357 + $0x80] sm:$0xff] %vm707, %v691
      %725 = vst.msk [vmem:[%s357 + $0x88] sm:$0xff] %vm707, %v692
      %726 = vst.msk [vmem:[%s357 + $0x90] sm:$0xff] %vm707, %v693
      %727 = vst.msk [vmem:[%s357 + $0x98] sm:$0xff] %vm707, %v694
      %728 = vst.msk [vmem:[%s357 + $0xa0] sm:$0xff] %vm707, %v695
      %729 = vst.msk [vmem:[%s357 + $0xa8] sm:$0xff] %vm707, %v696
      %730 = vst.msk [vmem:[%s357 + $0xb0] sm:$0xff] %vm707, %v697
      %731 = vst.msk [vmem:[%s357 + $0xb8] sm:$0xff] %vm707, %v698
      %732 = vst.msk [vmem:[%s357 + $0xc0] sm:$0xff] %vm707, %v699
      %733 = vst.msk [vmem:[%s357 + $0xc8] sm:$0xff] %vm707, %v700
      %734 = vst.msk [vmem:[%s357 + $0xd0] sm:$0xff] %vm707, %v701
      %735 = vst.msk [vmem:[%s357 + $0xd8] sm:$0xff] %vm707, %v702
      %736 = vst.msk [vmem:[%s357 + $0xe0] sm:$0xff] %vm707, %v703
      %737 = vst.msk [vmem:[%s357 + $0xe8] sm:$0xff] %vm707, %v704
      %738 = vst.msk [vmem:[%s357 + $0xf0] sm:$0xff] %vm707, %v705
      %739 = vst.msk [vmem:[%s357 + $0xf8] sm:$0xff] %vm707, %v706
      %s740 = smul.u32 32, %s24
      %p741 = scmp.lt.s32.totalorder %s23, 1
      %s742 = scalar_select %p741, %s23, 1
      %p743 = scmp.lt.s32.totalorder %s740, 31
      %s744 = scalar_select %p743, %s740, 31
      %s745 = smul.addr %s742, 32
      %s746 = sadd.s32 %s744, %s745
      %s747 = smul.addr %s746, 8
      %s748 = scalar_lea.vmem %s8, %s747
      // Predicated region
      $region57: #{unet_up_forward.5} parent=51 // pred_check
        %p749 = pneg %p231
      $region58: #{unet_up_forward.5} parent=51 // pred_check_branch
        %751 = sbr.rel (%p749) target = $region60
      $region59: #{unet_up_forward.5} parent=51 // pred_region
        %s752 = smul.u32 32, %s24
      $region60: #{unet_up_forward.5} parent=51 // pred_fallthru
        _
    $region52: #{unet_up_forward.5} parent=5 // pred_fallthru
      _
    %p753 = scmp.le.s32.totalorder 2, %s14
    // Predicated region
    $region61: #{unet_up_forward.5} parent=5 // pred_check
      %p754 = pneg %p753
    $region62: #{unet_up_forward.5} parent=5 // pred_check_branch
      %756 = sbr.rel (%p754) target = $region64
    $region63: #{unet_up_forward.5} parent=5 // pred_region
      %s757 = ssub.s32 %s14, 2
      // Predicated region
      $region65: #{unet_up_forward.5} parent=63 // pred_check
        %p758 = pneg %p237
      $region66: #{unet_up_forward.5} parent=63 // pred_check_branch
        %760 = sbr.rel (%p758) target = $region68
      $region67: #{unet_up_forward.5} parent=63 // pred_region
        %s761 = smul.u32 32, %s26
        %p762 = scmp.lt.s32.totalorder %s25, 1
        %s763 = scalar_select %p762, %s25, 1
        %p764 = scmp.lt.s32.totalorder %s761, 31
        %s765 = scalar_select %p764, %s761, 31
        %s766 = smul.addr %s763, 32
        %s767 = sadd.s32 %s765, %s766
        %s768 = smul.addr %s767, 8
        %s769 = scalar_lea.vmem %s8, %s768
      $region68: #{unet_up_forward.5} parent=63 // pred_fallthru
        _
    $region64: #{unet_up_forward.5} parent=5 // pred_fallthru
      _
  $region6: #{unet_up_forward.5} parent=0 // loop_footer
    %s18 = sadd.s32 1, %s14
  $region7: #{unet_up_forward.5} parent=0 // loop_footer_branch
    %13 = sbr.rel target = $region3
  $region8: #{unet_up_forward.5} parent=0 // loop_exit
    _

// kernel: unet_up_forward.3
$region0: #{unet_up_forward.3}
  #allocation0 [shape = 'u32[]', space=smem, size = 0x4, offset = 0x4, fixed_abs, tag = 'smem constant byte address 0x4 - core index']
  #allocation1 [shape = 'u32[144,128]{1,0:T(1,128)}', space=vmem, size = 0x12000, scoped, tag = 'internal scratch']
  %s0 = inlined_call_operand.vmem [shape: bf16[8,9,9,16], index: 0, kind: input, shape index: {}]
  %s1 = inlined_call_operand.vmem [shape: bf16[16,16,32], index: 1, kind: input, shape index: {}]
  %s2 = inlined_call_operand.vmem [shape: f32[2,4,64,32], index: 2, kind: output, shape index: {0}]
  %s3 = inlined_call_operand.vmem [shape: f32[2,1,32], index: 3, kind: output, shape index: {1}]
  %s4 = inlined_call_operand.vmem [shape: f32[2,1,32], index: 4, kind: output, shape index: {2}]
  %5 = xla_tuple %s2, %s3, %s4
  %s6 = sld [smem:[#allocation0]]
  $region61: #{unet_up_forward.3} parent=0
    _
  %s8 = ssub.s32 1, %s6
  %s9 = scalar_select 0, %s8, %s6
  loop: start=0, step=1, limit=10
  $region2: #{unet_up_forward.3} parent=0 // loop_pre_header
    _
  $region3: #{unet_up_forward.3} parent=0 // loop_header
    %s11 = sphi 0, %s15
    %p12 = scmp.ge.s32.totalorder %s11, 10
    %s18 = sphi 0, %s37
    %s19 = sphi 0, %s33
    %s20 = sphi 0, %s29
    %s21 = sphi 0, %s18
    %s22 = sphi 0, %s19
    %s23 = sphi 0, %s20
    %s24 = sphi 0, %s21
    %s25 = sphi 0, %s22
    %s26 = sphi 0, %s23
    %s44 = sphi 0, %s46
    %s47 = sphi 0, %s44
    %s48 = sphi 0, %s47
    %s64 = sphi 0, %s48
    %s72 = sphi 0, %s74
    %s75 = sphi 0, %s72
    %s76 = sphi 0, %s75
    %s92 = sphi 0, %s76
    %s102 = sphi 0, %s104
    %s105 = sphi 0, %s102
    %s106 = sphi 0, %s105
    %s122 = sphi 0, %s106
    %s130 = sphi 0, %s132
    %s133 = sphi 0, %s130
    %s134 = sphi 0, %s133
    %s150 = sphi 0, %s134
    %s158 = sphi 0, %s160
    %s161 = sphi 0, %s158
    %s162 = sphi 0, %s161
    %s178 = sphi 0, %s162
  $region4: #{unet_up_forward.3} parent=0 // loop_header_branch
    %14 = sbr.rel (%p12) target = $region8
  $region5: #{unet_up_forward.3} parent=0 // loop_body
    %s16 = ssub.s32 %s11, 1
    %s17 = ssub.s32 %s11, 2
    %s27 = sadd.s32 1, %s20
    %p28 = scmp.ge.s32.totalorder %s27, 4
    %s29 = scalar_select %p28, 0, %s27
    %s30 = sadd.s32 1, %s19
    %s31 = scalar_select %p28, %s30, %s19
    %p32 = scmp.ge.s32.totalorder %s31, 1
    %s33 = scalar_select %p32, 0, %s31
    %s34 = sadd.s32 1, %s18
    %s35 = scalar_select %p32, %s34, %s18
    %p36 = scmp.ge.s32.totalorder %s35, 2
    %s37 = scalar_select %p36, 0, %s35
    %s38 = smul.u32 %s20, 2
    %s39 = sadd.s32 %s38, %s18
    %s40 = smul.u32 %s29, 2
    %s41 = sadd.s32 %s40, %s37
    %s42 = ssub.s32 %s39, %s41
    %p43 = scmp.eq.s32.totalorder %s42, 0
    %s45 = sadd.s32 %s44, 1
    %s46 = scalar_select %p43, %s44, %s45
    %p49 = pneg %p43
    %p50 = scmp.eq.s32.totalorder %s11, 7
    %p51 = por %p49, %p50
    %p52 = scmp.ne.s32.totalorder %s44, %s47
    %p53 = scmp.eq.s32.totalorder %s11, 0
    %p54 = por %p52, %p53
    %p55 = scmp.ne.s32.totalorder %s44, %s47
    %p56 = scmp.eq.s32.totalorder %s16, 7
    %p57 = por %p55, %p56
    %p58 = scmp.ne.s32.totalorder %s47, %s48
    %p59 = scmp.eq.s32.totalorder %s16, 0
    %p60 = por %p58, %p59
    %p61 = scmp.ne.s32.totalorder %s47, %s48
    %p62 = scmp.eq.s32.totalorder %s17, 7
    %p63 = por %p61, %p62
    %p65 = scmp.ne.s32.totalorder %s48, %s64
    %p66 = scmp.eq.s32.totalorder %s17, 0
    %p67 = por %p65, %p66
    %s68 = ssub.s32 %s20, %s29
    %s69 = ssub.s32 %s19, %s33
    %s70 = sor.u32 %s68, %s69
    %p71 = scmp.eq.s32.totalorder %s70, 0
    %s73 = sadd.s32 %s72, 1
    %s74 = scalar_select %p71, %s72, %s73
    %p77 = pneg %p71
    %p78 = scmp.eq.s32.totalorder %s11, 7
    %p79 = por %p77, %p78
    %p80 = scmp.ne.s32.totalorder %s72, %s75
    %p81 = scmp.eq.s32.totalorder %s11, 0
    %p82 = por %p80, %p81
    %p83 = scmp.ne.s32.totalorder %s72, %s75
    %p84 = scmp.eq.s32.totalorder %s16, 7
    %p85 = por %p83, %p84
    %p86 = scmp.ne.s32.totalorder %s75, %s76
    %p87 = scmp.eq.s32.totalorder %s16, 0
    %p88 = por %p86, %p87
    %p89 = scmp.ne.s32.totalorder %s75, %s76
    %p90 = scmp.eq.s32.totalorder %s17, 7
    %p91 = por %p89, %p90
    %p93 = scmp.ne.s32.totalorder %s76, %s92
    %p94 = scmp.eq.s32.totalorder %s17, 0
    %p95 = por %p93, %p94
    %s96 = ssub.s32 %s18, %s37
    %s97 = ssub.s32 %s20, %s29
    %s98 = sor.u32 %s96, %s97
    %s99 = ssub.s32 %s19, %s33
    %s100 = sor.u32 %s98, %s99
    %p101 = scmp.eq.s32.totalorder %s100, 0
    %s103 = sadd.s32 %s102, 1
    %s104 = scalar_select %p101, %s102, %s103
    %p107 = pneg %p101
    %p108 = scmp.eq.s32.totalorder %s11, 7
    %p109 = por %p107, %p108
    %p110 = scmp.ne.s32.totalorder %s102, %s105
    %p111 = scmp.eq.s32.totalorder %s11, 0
    %p112 = por %p110, %p111
    %p113 = scmp.ne.s32.totalorder %s102, %s105
    %p114 = scmp.eq.s32.totalorder %s16, 7
    %p115 = por %p113, %p114
    %p116 = scmp.ne.s32.totalorder %s105, %s106
    %p117 = scmp.eq.s32.totalorder %s16, 0
    %p118 = por %p116, %p117
    %p119 = scmp.ne.s32.totalorder %s105, %s106
    %p120 = scmp.eq.s32.totalorder %s17, 7
    %p121 = por %p119, %p120
    %p123 = scmp.ne.s32.totalorder %s106, %s122
    %p124 = scmp.eq.s32.totalorder %s17, 0
    %p125 = por %p123, %p124
    %s126 = ssub.s32 %s18, %s37
    %s127 = ssub.s32 %s19, %s33
    %s128 = sor.u32 %s126, %s127
    %p129 = scmp.eq.s32.totalorder %s128, 0
    %s131 = sadd.s32 %s130, 1
    %s132 = scalar_select %p129, %s130, %s131
    %p135 = pneg %p129
    %p136 = scmp.eq.s32.totalorder %s11, 7
    %p137 = por %p135, %p136
    %p138 = scmp.ne.s32.totalorder %s130, %s133
    %p139 = scmp.eq.s32.totalorder %s11, 0
    %p140 = por %p138, %p139
    %p141 = scmp.ne.s32.totalorder %s130, %s133
    %p142 = scmp.eq.s32.totalorder %s16, 7
    %p143 = por %p141, %p142
    %p144 = scmp.ne.s32.totalorder %s133, %s134
    %p145 = scmp.eq.s32.totalorder %s16, 0
    %p146 = por %p144, %p145
    %p147 = scmp.ne.s32.totalorder %s133, %s134
    %p148 = scmp.eq.s32.totalorder %s17, 7
    %p149 = por %p147, %p148
    %p151 = scmp.ne.s32.totalorder %s134, %s150
    %p152 = scmp.eq.s32.totalorder %s17, 0
    %p153 = por %p151, %p152
    %s154 = ssub.s32 %s18, %s37
    %s155 = ssub.s32 %s19, %s33
    %s156 = sor.u32 %s154, %s155
    %p157 = scmp.eq.s32.totalorder %s156, 0
    %s159 = sadd.s32 %s158, 1
    %s160 = scalar_select %p157, %s158, %s159
    %p163 = pneg %p157
    %p164 = scmp.eq.s32.totalorder %s11, 7
    %p165 = por %p163, %p164
    %p166 = scmp.ne.s32.totalorder %s158, %s161
    %p167 = scmp.eq.s32.totalorder %s11, 0
    %p168 = por %p166, %p167
    %p169 = scmp.ne.s32.totalorder %s158, %s161
    %p170 = scmp.eq.s32.totalorder %s16, 7
    %p171 = por %p169, %p170
    %p172 = scmp.ne.s32.totalorder %s161, %s162
    %p173 = scmp.eq.s32.totalorder %s16, 0
    %p174 = por %p172, %p173
    %p175 = scmp.ne.s32.totalorder %s161, %s162
    %p176 = scmp.eq.s32.totalorder %s17, 7
    %p177 = por %p175, %p176
    %p179 = scmp.ne.s32.totalorder %s162, %s178
    %p180 = scmp.eq.s32.totalorder %s17, 0
    %p181 = por %p179, %p180
    %p182 = scmp.le.s32.totalorder 1, %s11
    %p183 = scmp.lt.s32.totalorder %s11, 9
    %p184 = pnand %p182, %p183
    %p185 = pneg %p184
    // Predicated region
    $region9: #{unet_up_forward.3} parent=5 // pred_check
      _
    $region10: #{unet_up_forward.3} parent=5 // pred_check_branch
      %187 = sbr.rel (%p184) target = $region12
    $region11: #{unet_up_forward.3} parent=5 // pred_region
      %s188 = ssub.s32 %s11, 1
    $region12: #{unet_up_forward.3} parent=5 // pred_fallthru
      _
    %p189 = scmp.lt.s32.totalorder %s11, 8
    // Predicated region
    $region13: #{unet_up_forward.3} parent=5 // pred_check
      %p190 = pneg %p189
    $region14: #{unet_up_forward.3} parent=5 // pred_check_branch
      %192 = sbr.rel (%p190) target = $region16
    $region15: #{unet_up_forward.3} parent=5 // pred_region
      // Predicated region
      $region17: #{unet_up_forward.3} parent=15 // pred_check
        %p193 = pneg %p54
      $region18: #{unet_up_forward.3} parent=15 // pred_check_branch
        %195 = sbr.rel (%p193) target = $region20
      $region19: #{unet_up_forward.3} parent=15 // pred_region
        %s196 = smul.u32 %s20, 2
        %s197 = sadd.s32 %s196, %s18
        %p198 = scmp.lt.s32.totalorder %s197, 7
        %s199 = scalar_select %p198, %s197, 7
        %s200 = smul.addr %s199, 18
        %s201 = smul.addr %s200, 4
        %s202 = scalar_lea.vmem %s0, %s201
        %s203 = smul.u32 %s20, 2
        %s204 = sadd.s32 %s203, %s18
      $region20: #{unet_up_forward.3} parent=15 // pred_fallthru
        _
      // Predicated region
      $region21: #{unet_up_forward.3} parent=15 // pred_check
        %p205 = pneg %p82
      $region22: #{unet_up_forward.3} parent=15 // pred_check_branch
        %207 = sbr.rel (%p205) target = $region24
      $region23: #{unet_up_forward.3} parent=15 // pred_region
        %s208 = smul.u32 4, %s20
        %p209 = scmp.lt.s32.totalorder %s208, 15
        %s210 = scalar_select %p209, %s208, 15
        %p211 = scmp.lt.s32.totalorder %s19, 0
        %s212 = scalar_select %p211, %s19, 0
        %s213 = smul.addr %s210, 2
        %s214 = sadd.s32 %s212, %s213
        %s215 = smul.addr %s214, 4
        %s216 = scalar_lea.vmem %s1, %s215
        %s217 = smul.u32 4, %s20
      $region24: #{unet_up_forward.3} parent=15 // pred_fallthru
        _
    $region16: #{unet_up_forward.3} parent=5 // pred_fallthru
      _
    %p218 = scmp.le.s32.totalorder 1, %s11
    %p219 = scmp.lt.s32.totalorder %s11, 9
    %p220 = pnand %p218, %p219
    %p221 = pneg %p220
    // Predicated region
    $region25: #{unet_up_forward.3} parent=5 // pred_check
      _
    $region26: #{unet_up_forward.3} parent=5 // pred_check_branch
      %223 = sbr.rel (%p220) target = $region28
    $region27: #{unet_up_forward.3} parent=5 // pred_region
      %s224 = ssub.s32 %s11, 1
      %s225 = smul.u32 %s23, 2
      %s226 = sadd.s32 %s225, %s21
      %p227 = scmp.lt.s32.totalorder %s226, 7
      %s228 = scalar_select %p227, %s226, 7
      %s229 = smul.addr %s228, 18
      %s230 = smul.addr %s229, 4
      %s231 = scalar_lea.vmem %s0, %s230
      %p232 = pneg %p60
      %p233 = pneg %p57
      %s234 = smul.u32 4, %s23
      %p235 = scmp.lt.s32.totalorder %s234, 15
      %s236 = scalar_select %p235, %s234, 15
      %p237 = scmp.lt.s32.totalorder %s22, 0
      %s238 = scalar_select %p237, %s22, 0
      %s239 = smul.addr %s236, 2
      %s240 = sadd.s32 %s238, %s239
      %s241 = smul.addr %s240, 4
      %s242 = scalar_lea.vmem %s1, %s241
      %p243 = pneg %p88
      %p244 = pneg %p85
      %p245 = pneg %p118
      %p246 = pneg %p115
      %p247 = scmp.lt.s32.totalorder %s21, 1
      %s248 = scalar_select %p247, %s21, 1
      %p249 = scmp.lt.s32.totalorder %s23, 3
      %s250 = scalar_select %p249, %s23, 3
      %p251 = scmp.lt.s32.totalorder %s22, 0
      %s252 = scalar_select %p251, %s22, 0
      %s253 = smul.addr %s250, 8
      %s254 = sadd.s32 %s252, %s253
      %s255 = smul.addr %s248, 32
      %s256 = sadd.s32 %s254, %s255
      %s257 = smul.addr %s256, 8
      %s258 = scalar_lea.vmem %s2, %s257
      %p259 = pneg %p146
      %p260 = pneg %p143
      %p261 = scmp.lt.s32.totalorder %s21, 1
      %s262 = scalar_select %p261, %s21, 1
      %p263 = scmp.lt.s32.totalorder %s22, 0
      %s264 = scalar_select %p263, %s22, 0
      %s265 = sadd.s32 %s264, %s262
      %s266 = scalar_lea.vmem %s3, %s265
      %p267 = pneg %p174
      %p268 = pneg %p171
      %p269 = scmp.lt.s32.totalorder %s21, 1
      %s270 = scalar_select %p269, %s21, 1
      %p271 = scmp.lt.s32.totalorder %s22, 0
      %s272 = scalar_select %p271, %s22, 0
      %s273 = sadd.s32 %s272, %s270
      %s274 = scalar_lea.vmem %s4, %s273
      %s275 = smul.u32 %s23, 2
      %s276 = sadd.s32 %s275, %s21
      %p277 = scmp.lt.s32.totalorder %s276, 7
      %s278 = scalar_select %p277, %s276, 7
      %s279 = smul.addr %s278, 18
      %s280 = smul.addr %s279, 4
      %s281 = scalar_lea.vmem %s0, %s280
      %s282 = smul.u32 %s23, 2
      %s283 = sadd.s32 %s282, %s21
      %s284 = smul.u32 4, %s23
      %p285 = scmp.lt.s32.totalorder %s284, 15
      %s286 = scalar_select %p285, %s284, 15
      %p287 = scmp.lt.s32.totalorder %s22, 0
      %s288 = scalar_select %p287, %s22, 0
      %s289 = smul.addr %s286, 2
      %s290 = sadd.s32 %s288, %s289
      %s291 = smul.addr %s290, 4
      %s292 = scalar_lea.vmem %s1, %s291
      %s293 = smul.u32 4, %s23
      %p294 = scmp.lt.s32.totalorder %s21, 1
      %s295 = scalar_select %p294, %s21, 1
      %p296 = scmp.lt.s32.totalorder %s23, 3
      %s297 = scalar_select %p296, %s23, 3
      %p298 = scmp.lt.s32.totalorder %s22, 0
      %s299 = scalar_select %p298, %s22, 0
      %s300 = smul.addr %s297, 8
      %s301 = sadd.s32 %s299, %s300
      %s302 = smul.addr %s295, 32
      %s303 = sadd.s32 %s301, %s302
      %s304 = smul.addr %s303, 8
      %s305 = scalar_lea.vmem %s2, %s304
      %p306 = scmp.lt.s32.totalorder %s21, 1
      %s307 = scalar_select %p306, %s21, 1
      %p308 = scmp.lt.s32.totalorder %s22, 0
      %s309 = scalar_select %p308, %s22, 0
      %s310 = sadd.s32 %s309, %s307
      %s311 = scalar_lea.vmem %s3, %s310
      %p312 = scmp.lt.s32.totalorder %s21, 1
      %s313 = scalar_select %p312, %s21, 1
      %p314 = scmp.lt.s32.totalorder %s22, 0
      %s315 = scalar_select %p314, %s22, 0
      %s316 = sadd.s32 %s315, %s313
      %s317 = scalar_lea.vmem %s4, %s316
      %v319 = vld [vmem:[%s281] sm:$0xf]
      %v320 = vld [vmem:[%s281 + $0x8] sm:$0xf]
      %v321 = vld [vmem:[%s281 + $0x10] sm:$0xf]
      %v322 = vld [vmem:[%s281 + $0x18] sm:$0xf]
      %v323 = vld [vmem:[%s281 + $0x20] sm:$0xf]
      %v324 = vld [vmem:[%s281 + $0x28] sm:$0xf]
      %v325 = vld [vmem:[%s281 + $0x30] sm:$0xf]
      %v326 = vld [vmem:[%s281 + $0x38] sm:$0xf]
      %v327 = vld [vmem:[%s292] sm:$0xf]
      %v328 = vld [vmem:[%s292 + $0x4] sm:$0xf]
      %v329 = vld [vmem:[%s281 + $0x4] sm:$0x1]
      %v330 = vld [vmem:[%s281 + $0xc] sm:$0x1]
      %v331 = vld [vmem:[%s281 + $0x14] sm:$0x1]
      %v332 = vld [vmem:[%s281 + $0x1c] sm:$0x1]
      %v333 = vld [vmem:[%s281 + $0x24] sm:$0x1]
      %v334 = vld [vmem:[%s281 + $0x2c] sm:$0x1]
      %v335 = vld [vmem:[%s281 + $0x34] sm:$0x1]
      %v336 = vld [vmem:[%s281 + $0x3c] sm:$0x1]
      %vm337 = vsmask.f32 3328
      %vm338 = vsmask.f32 7440
      %vm339 = vmor %vm337, %vm338
      %v341 = vshrl.u32 %v319, 16
      %v343 = vrot.slane %v341, 4
      %v344 = vshll.u32 %v319, 16
      %v346 = vrot.slane %v344, 5
      %v347 = vor.u32 %v343, %v346
      %v348 = vrot.slane %v347, 4
      %v350 = vshll.u32 %v329, 16
      %v352 = vrot.slane %v350, 5
      %v353 = vsel %vm339, %v348, %v352
      %v355 = vshrl.u32 %v320, 16
      %v357 = vrot.slane %v355, 4
      %v358 = vshll.u32 %v320, 16
      %v360 = vrot.slane %v358, 5
      %v361 = vor.u32 %v357, %v360
      %v362 = vrot.slane %v361, 4
      %v364 = vshll.u32 %v330, 16
      %v366 = vrot.slane %v364, 5
      %v367 = vsel %vm339, %v362, %v366
      %v369 = vshrl.u32 %v321, 16
      %v371 = vrot.slane %v369, 4
      %v372 = vshll.u32 %v321, 16
      %v374 = vrot.slane %v372, 5
      %v375 = vor.u32 %v371, %v374
      %v376 = vrot.slane %v375, 4
      %v378 = vshll.u32 %v331, 16
      %v380 = vrot.slane %v378, 5
      %v381 = vsel %vm339, %v376, %v380
      %v383 = vshrl.u32 %v322, 16
      %v385 = vrot.slane %v383, 4
      %v386 = vshll.u32 %v322, 16
      %v388 = vrot.slane %v386, 5
      %v389 = vor.u32 %v385, %v388
      %v390 = vrot.slane %v389, 4
      %v392 = vshll.u32 %v332, 16
      %v394 = vrot.slane %v392, 5
      %v395 = vsel %vm339, %v390, %v394
      %v397 = vshrl.u32 %v323, 16
      %v399 = vrot.slane %v397, 4
      %v400 = vshll.u32 %v323, 16
      %v402 = vrot.slane %v400, 5
      %v403 = vor.u32 %v399, %v402
      %v404 = vrot.slane %v403, 4
      %v406 = vshll.u32 %v333, 16
      %v408 = vrot.slane %v406, 5
      %v409 = vsel %vm339, %v404, %v408
      %v411 = vshrl.u32 %v324, 16
      %v413 = vrot.slane %v411, 4
      %v414 = vshll.u32 %v324, 16
      %v416 = vrot.slane %v414, 5
      %v417 = vor.u32 %v413, %v416
      %v418 = vrot.slane %v417, 4
      %v420 = vshll.u32 %v334, 16
      %v422 = vrot.slane %v420, 5
      %v423 = vsel %vm339, %v418, %v422
      %v425 = vshrl.u32 %v325, 16
      %v427 = vrot.slane %v425, 4
      %v428 = vshll.u32 %v325, 16
      %v430 = vrot.slane %v428, 5
      %v431 = vor.u32 %v427, %v430
      %v432 = vrot.slane %v431, 4
      %v434 = vshll.u32 %v335, 16
      %v436 = vrot.slane %v434, 5
      %v437 = vsel %vm339, %v432, %v436
      %v439 = vshrl.u32 %v326, 16
      %v441 = vrot.slane %v439, 4
      %v442 = vshll.u32 %v326, 16
      %v444 = vrot.slane %v442, 5
      %v445 = vor.u32 %v441, %v444
      %v446 = vrot.slane %v445, 4
      %v448 = vshll.u32 %v336, 16
      %v450 = vrot.slane %v448, 5
      %v451 = vsel %vm339, %v446, %v450
      %s452 = scalar_lea.vmem %s292, 8
      %v453 = vld [vmem:[%s452] sm:$0xf]
      %v454 = vld [vmem:[%s452 + $0x4] sm:$0xf]
      %v455 = vunpack.c.l.b16 %v353
      %v456 = vunpack.c.l.b16 %v367
      %v457 = vunpack.c.l.b16 %v381
      %v458 = vunpack.c.l.b16 %v395
      %v459 = vunpack.c.l.b16 %v409
      %v460 = vunpack.c.l.b16 %v423
      %v461 = vunpack.c.l.b16 %v437
      %v462 = vunpack.c.l.b16 %v451
      %v463 = vpack.c.b16 %v456, %v455
      %v464 = vpack.c.b16 %v458, %v457
      %v465 = vpack.c.b16 %v460, %v459
      %v466 = vpack.c.b16 %v462, %v461
      %v469 = vunpack.c.l.b16 %v453
      %v470 = vunpack.c.l.b16 %v454
      %v471 = vpack.c.b16 %v470, %v469
      %vm473 = vcmask 130048
      %v475 = vsel %vm473, %v463, 0
      %v478 = vsel %vm473, %v464, 0
      %v481 = vsel %vm473, %v465, 0
      %v484 = vsel %vm473, %v466, 0
      %486 = vmatprep.subr.bf16.mxu0 0
      %487 = vmatpush1.bf16.msra.mxu0 %v471
      %488 = vmatprep.subr.bf16.mxu0 0
      %489 = vmatpush1.bf16.msra.mxu0 0
      %490 = vmatprep.subr.bf16.mxu0 0
      %491 = vmatpush1.bf16.msra.mxu0 0
      %492 = vmatprep.subr.bf16.mxu0 0
      %493 = vmatpush1.bf16.msra.mxu0 0
      %494 = vmatprep.subr.bf16.mxu0 0
      %495 = vmatpush1.bf16.msra.mxu0 0
      %496 = vmatprep.subr.bf16.mxu0 0
      %497 = vmatpush1.bf16.msra.mxu0 0
      %498 = vmatprep.subr.bf16.mxu0 0
      %499 = vmatpush1.bf16.msra.mxu0 0
      %500 = vmatprep.subr.bf16.mxu0 0
      %501 = vmatpush1.bf16.msra.mxu0 0
      %502 = vmatprep.subr.bf16.mxu0 0
      %503 = vmatpush1.bf16.msra.mxu0 0
      %504 = vmatprep.subr.bf16.mxu0 0
      %505 = vmatpush1.bf16.msra.mxu0 0
      %506 = vmatprep.subr.bf16.mxu0 0
      %507 = vmatpush1.bf16.msra.mxu0 0
      %508 = vmatprep.subr.bf16.mxu0 0
      %509 = vmatpush1.bf16.msra.mxu0 0
      %510 = vmatprep.subr.bf16.mxu0 0
      %511 = vmatpush1.bf16.msra.mxu0 0
      %512 = vmatprep.subr.bf16.mxu0 0
      %513 = vmatpush1.bf16.msra.mxu0 0
      %514 = vmatprep.subr.bf16.mxu0 0
      %515 = vmatpush1.bf16.msra.mxu0 0
      %516 = vmatprep.subr.bf16.mxu0 0
      %517 = vmatpush1.bf16.msra.mxu0 0
      %518 = vmatprep.mubr.bf16.mxu0 0
      %519 = vmatmul.mubr.bf16.gmra.mrb[0].mxu0 %v475
      %v520 = vpop.f32.mrb[0].mxu0
      %v521 = vadd.f32 0.0, %v520
      %v522 = vpop.f32.mrb[0].mxu0
      %v523 = vpop.f32.mrb[0].mxu0
      %v524 = vadd.f32 0.0, %v523
      %v525 = vpop.f32.mrb[0].mxu0
      %526 = vmatprep.mubr.bf16.mxu0 0
      %527 = vmatmul.mubr.bf16.gmra.mrb[0].mxu0 %v478
      %v528 = vpop.f32.mrb[0].mxu0
      %v529 = vadd.f32 0.0, %v528
      %v530 = vpop.f32.mrb[0].mxu0
      %v531 = vpop.f32.mrb[0].mxu0
      %v532 = vadd.f32 0.0, %v531
      %v533 = vpop.f32.mrb[0].mxu0
      %534 = vmatprep.mubr.bf16.mxu0 0
      %535 = vmatmul.mubr.bf16.gmra.mrb[0].mxu0 %v481
      %v536 = vpop.f32.mrb[0].mxu0
      %v537 = vadd.f32 0.0, %v536
      %v538 = vpop.f32.mrb[0].mxu0
      %v539 = vpop.f32.mrb[0].mxu0
      %v540 = vadd.f32 0.0, %v539
      %v541 = vpop.f32.mrb[0].mxu0
      %542 = vmatprep.mubr.bf16.mxu0 0
      %543 = vmatmul.mubr.bf16.gmra.mrb[0].mxu0 %v484
      %v544 = vpop.f32.mrb[0].mxu0
      %v545 = vadd.f32 0.0, %v544
      %v546 = vpop.f32.mrb[0].mxu0
      %v547 = vpop.f32.mrb[0].mxu0
      %v548 = vadd.f32 0.0, %v547
      %v549 = vpop.f32.mrb[0].mxu0
      %550 = vdwg.mxu0
      %v559 = vunpack.c.l.b16 %v319
      %v560 = vunpack.c.l.b16 %v320
      %v561 = vunpack.c.l.b16 %v321
      %v562 = vunpack.c.l.b16 %v322
      %v563 = vunpack.c.l.b16 %v323
      %v564 = vunpack.c.l.b16 %v324
      %v565 = vunpack.c.l.b16 %v325
      %v566 = vunpack.c.l.b16 %v326
      %v567 = vpack.c.b16 %v560, %v559
      %v568 = vpack.c.b16 %v562, %v561
      %v569 = vpack.c.b16 %v564, %v563
      %v570 = vpack.c.b16 %v566, %v565
      %v573 = vunpack.c.l.b16 %v327
      %v574 = vunpack.c.l.b16 %v328
      %v575 = vpack.c.b16 %v574, %v573
      %v578 = vsel %vm473, %v567, 0
      %v581 = vsel %vm473, %v568, 0
      %v584 = vsel %vm473, %v569, 0
      %v587 = vsel %vm473, %v570, 0
      %589 = vmatprep.subr.bf16.mxu0 0
      %590 = vmatpush1.bf16.msra.mxu0 %v575
      %591 = vmatprep.subr.bf16.mxu0 0
      %592 = vmatpush1.bf16.msra.mxu0 0
      %593 = vmatprep.subr.bf16.mxu0 0
      %594 = vmatpush1.bf16.msra.mxu0 0
      %595 = vmatprep.subr.bf16.mxu0 0
      %596 = vmatpush1.bf16.msra.mxu0 0
      %597 = vmatprep.subr.bf16.mxu0 0
      %598 = vmatpush1.bf16.msra.mxu0 0
      %599 = vmatprep.subr.bf16.mxu0 0
      %600 = vmatpush1.bf16.msra.mxu0 0
      %601 = vmatprep.subr.bf16.mxu0 0
      %602 = vmatpush1.bf16.msra.mxu0 0
      %603 = vmatprep.subr.bf16.mxu0 0
      %604 = vmatpush1.bf16.msra.mxu0 0
      %605 = vmatprep.subr.bf16.mxu0 0
      %606 = vmatpush1.bf16.msra.mxu0 0
      %607 = vmatprep.subr.bf16.mxu0 0
      %608 = vmatpush1.bf16.msra.mxu0 0
      %609 = vmatprep.subr.bf16.mxu0 0
      %610 = vmatpush1.bf16.msra.mxu0 0
      %611 = vmatprep.subr.bf16.mxu0 0
      %612 = vmatpush1.bf16.msra.mxu0 0
      %613 = vmatprep.subr.bf16.mxu0 0
      %614 = vmatpush1.bf16.msra.mxu0 0
      %615 = vmatprep.subr.bf16.mxu0 0
      %616 = vmatpush1.bf16.msra.mxu0 0
      %617 = vmatprep.subr.bf16.mxu0 0
      %618 = vmatpush1.bf16.msra.mxu0 0
      %619 = vmatprep.subr.bf16.mxu0 0
      %620 = vmatpush1.bf16.msra.mxu0 0
      %621 = vmatprep.mubr.bf16.mxu0 0
      %622 = vmatmul.mubr.bf16.gmra.mrb[0].mxu0 %v578
      %v623 = vpop.f32.mrb[0].mxu0
      %v624 = vadd.f32 %v521, %v623
      %v625 = vpop.f32.mrb[0].mxu0
      %v626 = vpop.f32.mrb[0].mxu0
      %v627 = vadd.f32 %v524, %v626
      %v628 = vpop.f32.mrb[0].mxu0
      %629 = vmatprep.mubr.bf16.mxu0 0
      %630 = vmatmul.mubr.bf16.gmra.mrb[0].mxu0 %v581
      %v631 = vpop.f32.mrb[0].mxu0
      %v632 = vadd.f32 %v529, %v631
      %v633 = vpop.f32.mrb[0].mxu0
      %v634 = vpop.f32.mrb[0].mxu0
      %v635 = vadd.f32 %v532, %v634
      %v636 = vpop.f32.mrb[0].mxu0
      %637 = vmatprep.mubr.bf16.mxu0 0
      %638 = vmatmul.mubr.bf16.gmra.mrb[0].mxu0 %v584
      %v639 = vpop.f32.mrb[0].mxu0
      %v640 = vadd.f32 %v537, %v639
      %v641 = vpop.f32.mrb[0].mxu0
      %v642 = vpop.f32.mrb[0].mxu0
      %v643 = vadd.f32 %v540, %v642
      %v644 = vpop.f32.mrb[0].mxu0
      %645 = vmatprep.mubr.bf16.mxu0 0
      %646 = vmatmul.mubr.bf16.gmra.mrb[0].mxu0 %v587
      %v647 = vpop.f32.mrb[0].mxu0
      %v648 = vadd.f32 %v545, %v647
      %v649 = vpop.f32.mrb[0].mxu0
      %v650 = vpop.f32.mrb[0].mxu0
      %v651 = vadd.f32 %v548, %v650
      %v652 = vpop.f32.mrb[0].mxu0
      %653 = vdwg.mxu0
      %s654 = scalar_lea.vmem %s281, 8
      %v655 = vld [vmem:[%s654] sm:$0xf]
      %v656 = vld [vmem:[%s654 + $0x8] sm:$0xf]
      %v657 = vld [vmem:[%s654 + $0x10] sm:$0xf]
      %v658 = vld [vmem:[%s654 + $0x18] sm:$0xf]
      %v659 = vld [vmem:[%s654 + $0x20] sm:$0xf]
      %v660 = vld [vmem:[%s654 + $0x28] sm:$0xf]
      %v661 = vld [vmem:[%s654 + $0x30] sm:$0xf]
      %v662 = vld [vmem:[%s654 + $0x38] sm:$0xf]
      %s663 = scalar_lea.vmem %s292, 16
      %v664 = vld [vmem:[%s663] sm:$0xf]
      %v665 = vld [vmem:[%s663 + $0x4] sm:$0xf]
      %v674 = vunpack.c.l.b16 %v655
      %v675 = vunpack.c.l.b16 %v656
      %v676 = vunpack.c.l.b16 %v657
      %v677 = vunpack.c.l.b16 %v658
      %v678 = vunpack.c.l.b16 %v659
      %v679 = vunpack.c.l.b16 %v660
      %v680 = vunpack.c.l.b16 %v661
      %v681 = vunpack.c.l.b16 %v662
      %v682 = vpack.c.b16 %v675, %v674
      %v683 = vpack.c.b16 %v677, %v676
      %v684 = vpack.c.b16 %v679, %v678
      %v685 = vpack.c.b16 %v681, %v680
      %v688 = vunpack.c.l.b16 %v664
      %v689 = vunpack.c.l.b16 %v665
      %v690 = vpack.c.b16 %v689, %v688
      %v693 = vsel %vm473, %v682, 0
      %v696 = vsel %vm473, %v683, 0
      %v699 = vsel %vm473, %v684, 0
      %v702 = vsel %vm473, %v685, 0
      %704 = vmatprep.subr.bf16.mxu0 0
      %705 = vmatpush1.bf16.msra.mxu0 %v690
      %706 = vmatprep.subr.bf16.mxu0 0
      %707 = vmatpush1.bf16.msra.mxu0 0
      %708 = vmatprep.subr.bf16.mxu0 0
      %709 = vmatpush1.bf16.msra.mxu0 0
      %710 = vmatprep.subr.bf16.mxu0 0
      %711 = vmatpush1.bf16.msra.mxu0 0
      %712 = vmatprep.subr.bf16.mxu0 0
      %713 = vmatpush1.bf16.msra.mxu0 0
      %714 = vmatprep.subr.bf16.mxu0 0
      %715 = vmatpush1.bf16.msra.mxu0 0
      %716 = vmatprep.subr.bf16.mxu0 0
      %717 = vmatpush1.bf16.msra.mxu0 0
      %718 = vmatprep.subr.bf16.mxu0 0
      %719 = vmatpush1.bf16.msra.mxu0 0
      %720 = vmatprep.subr.bf16.mxu0 0
      %721 = vmatpush1.bf16.msra.mxu0 0
      %722 = vmatprep.subr.bf16.mxu0 0
      %723 = vmatpush1.bf16.msra.mxu0 0
      %724 = vmatprep.subr.bf16.mxu0 0
      %725 = vmatpush1.bf16.msra.mxu0 0
      %726 = vmatprep.subr.bf16.mxu0 0
      %727 = vmatpush1.bf16.msra.mxu0 0
      %728 = vmatprep.subr.bf16.mxu0 0
      %729 = vmatpush1.bf16.msra.mxu0 0
      %730 = vmatprep.subr.bf16.mxu0 0
      %731 = vmatpush1.bf16.msra.mxu0 0
      %732 = vmatprep.subr.bf16.mxu0 0
      %733 = vmatpush1.bf16.msra.mxu0 0
      %734 = vmatprep.subr.bf16.mxu0 0
      %735 = vmatpush1.bf16.msra.mxu0 0
      %736 = vmatprep.mubr.bf16.mxu0 0
      %737 = vmatmul.mubr.bf16.gmra.mrb[0].mxu0 %v693
      %v738 = vpop.f32.mrb[0].mxu0
      %v739 = vadd.f32 0.0, %v738
      %v740 = vpop.f32.mrb[0].mxu0
      %v741 = vpop.f32.mrb[0].mxu0
      %v742 = vadd.f32 0.0, %v741
      %v743 = vpop.f32.mrb[0].mxu0
      %744 = vmatprep.mubr.bf16.mxu0 0
      %745 = vmatmul.mubr.bf16.gmra.mrb[0].mxu0 %v696
      %v746 = vpop.f32.mrb[0].mxu0
      %v747 = vadd.f32 0.0, %v746
      %v748 = vpop.f32.mrb[0].mxu0
      %v749 = vpop.f32.mrb[0].mxu0
      %v750 = vadd.f32 0.0, %v749
      %v751 = vpop.f32.mrb[0].mxu0
      %752 = vmatprep.mubr.bf16.mxu0 0
      %753 = vmatmul.mubr.bf16.gmra.mrb[0].mxu0 %v699
      %v754 = vpop.f32.mrb[0].mxu0
      %v755 = vadd.f32 0.0, %v754
      %v756 = vpop.f32.mrb[0].mxu0
      %v757 = vpop.f32.mrb[0].mxu0
      %v758 = vadd.f32 0.0, %v757
      %v759 = vpop.f32.mrb[0].mxu0
      %760 = vmatprep.mubr.bf16.mxu0 0
      %761 = vmatmul.mubr.bf16.gmra.mrb[0].mxu0 %v702
      %v762 = vpop.f32.mrb[0].mxu0
      %v763 = vadd.f32 0.0, %v762
      %v764 = vpop.f32.mrb[0].mxu0
      %v765 = vpop.f32.mrb[0].mxu0
      %v766 = vadd.f32 0.0, %v765
      %v767 = vpop.f32.mrb[0].mxu0
      %768 = vdwg.mxu0
      %v769 = vadd.f32 %v624, %v739
      %v770 = vadd.f32 %v627, %v742
      %v771 = vadd.f32 %v632, %v747
      %v772 = vadd.f32 %v635, %v750
      %v773 = vadd.f32 %v640, %v755
      %v774 = vadd.f32 %v643, %v758
      %v775 = vadd.f32 %v648, %v763
      %v776 = vadd.f32 %v651, %v766
      %v777 = vld [vmem:[%s654] sm:$0xf]
      %v778 = vld [vmem:[%s654 + $0x4] sm:$0x1]
      %v779 = vld [vmem:[%s654 + $0x8] sm:$0xf]
      %v780 = vld [vmem:[%s654 + $0xc] sm:$0x1]
      %v781 = vld [vmem:[%s654 + $0x10] sm:$0xf]
      %v782 = vld [vmem:[%s654 + $0x14] sm:$0x1]
      %v783 = vld [vmem:[%s654 + $0x18] sm:$0xf]
      %v784 = vld [vmem:[%s654 + $0x1c] sm:$0x1]
      %v785 = vld [vmem:[%s654 + $0x20] sm:$0xf]
      %v786 = vld [vmem:[%s654 + $0x24] sm:$0x1]
      %v787 = vld [vmem:[%s654 + $0x28] sm:$0xf]
      %v788 = vld [vmem:[%s654 + $0x2c] sm:$0x1]
      %v789 = vld [vmem:[%s654 + $0x30] sm:$0xf]
      %v790 = vld [vmem:[%s654 + $0x34] sm:$0x1]
      %v791 = vld [vmem:[%s654 + $0x38] sm:$0xf]
      %v792 = vld [vmem:[%s654 + $0x3c] sm:$0x1]
      %v794 = vshrl.u32 %v777, 16
      %v796 = vrot.slane %v794, 4
      %v797 = vshll.u32 %v777, 16
      %v799 = vrot.slane %v797, 5
      %v800 = vor.u32 %v796, %v799
      %v801 = vrot.slane %v800, 4
      %v803 = vshll.u32 %v778, 16
      %v805 = vrot.slane %v803, 5
      %v806 = vsel %vm339, %v801, %v805
      %v808 = vshrl.u32 %v779, 16
      %v810 = vrot.slane %v808, 4
      %v811 = vshll.u32 %v779, 16
      %v813 = vrot.slane %v811, 5
      %v814 = vor.u32 %v810, %v813
      %v815 = vrot.slane %v814, 4
      %v817 = vshll.u32 %v780, 16
      %v819 = vrot.slane %v817, 5
      %v820 = vsel %vm339, %v815, %v819
      %v822 = vshrl.u32 %v781, 16
      %v824 = vrot.slane %v822, 4
      %v825 = vshll.u32 %v781, 16
      %v827 = vrot.slane %v825, 5
      %v828 = vor.u32 %v824, %v827
      %v829 = vrot.slane %v828, 4
      %v831 = vshll.u32 %v782, 16
      %v833 = vrot.slane %v831, 5
      %v834 = vsel %vm339, %v829, %v833
      %v836 = vshrl.u32 %v783, 16
      %v838 = vrot.slane %v836, 4
      %v839 = vshll.u32 %v783, 16
      %v841 = vrot.slane %v839, 5
      %v842 = vor.u32 %v838, %v841
      %v843 = vrot.slane %v842, 4
      %v845 = vshll.u32 %v784, 16
      %v847 = vrot.slane %v845, 5
      %v848 = vsel %vm339, %v843, %v847
      %v850 = vshrl.u32 %v785, 16
      %v852 = vrot.slane %v850, 4
      %v853 = vshll.u32 %v785, 16
      %v855 = vrot.slane %v853, 5
      %v856 = vor.u32 %v852, %v855
      %v857 = vrot.slane %v856, 4
      %v859 = vshll.u32 %v786, 16
      %v861 = vrot.slane %v859, 5
      %v862 = vsel %vm339, %v857, %v861
      %v864 = vshrl.u32 %v787, 16
      %v866 = vrot.slane %v864, 4
      %v867 = vshll.u32 %v787, 16
      %v869 = vrot.slane %v867, 5
      %v870 = vor.u32 %v866, %v869
      %v871 = vrot.slane %v870, 4
      %v873 = vshll.u32 %v788, 16
      %v875 = vrot.slane %v873, 5
      %v876 = vsel %vm339, %v871, %v875
      %v878 = vshrl.u32 %v789, 16
      %v880 = vrot.slane %v878, 4
      %v881 = vshll.u32 %v789, 16
      %v883 = vrot.slane %v881, 5
      %v884 = vor.u32 %v880, %v883
      %v885 = vrot.slane %v884, 4
      %v887 = vshll.u32 %v790, 16
      %v889 = vrot.slane %v887, 5
      %v890 = vsel %vm339, %v885, %v889
      %v892 = vshrl.u32 %v791, 16
      %v894 = vrot.slane %v892, 4
      %v895 = vshll.u32 %v791, 16
      %v897 = vrot.slane %v895, 5
      %v898 = vor.u32 %v894, %v897
      %v899 = vrot.slane %v898, 4
      %v901 = vshll.u32 %v792, 16
      %v903 = vrot.slane %v901, 5
      %v904 = vsel %vm339, %v899, %v903
      %s905 = scalar_lea.vmem %s292, 24
      %v906 = vld [vmem:[%s905] sm:$0xf]
      %v907 = vld [vmem:[%s905 + $0x4] sm:$0xf]
      %v908 = vunpack.c.l.b16 %v806
      %v909 = vunpack.c.l.b16 %v820
      %v910 = vunpack.c.l.b16 %v834
      %v911 = vunpack.c.l.b16 %v848
      %v912 = vunpack.c.l.b16 %v862
      %v913 = vunpack.c.l.b16 %v876
      %v914 = vunpack.c.l.b16 %v890
      %v915 = vunpack.c.l.b16 %v904
      %v916 = vpack.c.b16 %v909, %v908
      %v917 = vpack.c.b16 %v911, %v910
      %v918 = vpack.c.b16 %v913, %v912
      %v919 = vpack.c.b16 %v915, %v914
      %v922 = vunpack.c.l.b16 %v906
      %v923 = vunpack.c.l.b16 %v907
      %v924 = vpack.c.b16 %v923, %v922
      %v927 = vsel %vm473, %v916, 0
      %v930 = vsel %vm473, %v917, 0
      %v933 = vsel %vm473, %v918, 0
      %v936 = vsel %vm473, %v919, 0
      %938 = vmatprep.subr.bf16.mxu0 0
      %939 = vmatpush1.bf16.msra.mxu0 %v924
      %940 = vmatprep.subr.bf16.mxu0 0
      %941 = vmatpush1.bf16.msra.mxu0 0
      %942 = vmatprep.subr.bf16.mxu0 0
      %943 = vmatpush1.bf16.msra.mxu0 0
      %944 = vmatprep.subr.bf16.mxu0 0
      %945 = vmatpush1.bf16.msra.mxu0 0
      %946 = vmatprep.subr.bf16.mxu0 0
      %947 = vmatpush1.bf16.msra.mxu0 0
      %948 = vmatprep.subr.bf16.mxu0 0
      %949 = vmatpush1.bf16.msra.mxu0 0
      %950 = vmatprep.subr.bf16.mxu0 0
      %951 = vmatpush1.bf16.msra.mxu0 0
      %952 = vmatprep.subr.bf16.mxu0 0
      %953 = vmatpush1.bf16.msra.mxu0 0
      %954 = vmatprep.subr.bf16.mxu0 0
      %955 = vmatpush1.bf16.msra.mxu0 0
      %956 = vmatprep.subr.bf16.mxu0 0
      %957 = vmatpush1.bf16.msra.mxu0 0
      %958 = vmatprep.subr.bf16.mxu0 0
      %959 = vmatpush1.bf16.msra.mxu0 0
      %960 = vmatprep.subr.bf16.mxu0 0
      %961 = vmatpush1.bf16.msra.mxu0 0
      %962 = vmatprep.subr.bf16.mxu0 0
      %963 = vmatpush1.bf16.msra.mxu0 0
      %964 = vmatprep.subr.bf16.mxu0 0
      %965 = vmatpush1.bf16.msra.mxu0 0
      %966 = vmatprep.subr.bf16.mxu0 0
      %967 = vmatpush1.bf16.msra.mxu0 0
      %968 = vmatprep.subr.bf16.mxu0 0
      %969 = vmatpush1.bf16.msra.mxu0 0
      %970 = vmatprep.mubr.bf16.mxu0 0
      %971 = vmatmul.mubr.bf16.gmra.mrb[0].mxu0 %v927
      %v972 = vpop.f32.mrb[0].mxu0
      %v973 = vadd.f32 0.0, %v972
      %v974 = vpop.f32.mrb[0].mxu0
      %v975 = vpop.f32.mrb[0].mxu0
      %v976 = vadd.f32 0.0, %v975
      %v977 = vpop.f32.mrb[0].mxu0
      %978 = vmatprep.mubr.bf16.mxu0 0
      %979 = vmatmul.mubr.bf16.gmra.mrb[0].mxu0 %v930
      %v980 = vpop.f32.mrb[0].mxu0
      %v981 = vadd.f32 0.0, %v980
      %v982 = vpop.f32.mrb[0].mxu0
      %v983 = vpop.f32.mrb[0].mxu0
      %v984 = vadd.f32 0.0, %v983
      %v985 = vpop.f32.mrb[0].mxu0
      %986 = vmatprep.mubr.bf16.mxu0 0
      %987 = vmatmul.mubr.bf16.gmra.mrb[0].mxu0 %v933
      %v988 = vpop.f32.mrb[0].mxu0
      %v989 = vadd.f32 0.0, %v988
      %v990 = vpop.f32.mrb[0].mxu0
      %v991 = vpop.f32.mrb[0].mxu0
      %v992 = vadd.f32 0.0, %v991
      %v993 = vpop.f32.mrb[0].mxu0
      %994 = vmatprep.mubr.bf16.mxu0 0
      %995 = vmatmul.mubr.bf16.gmra.mrb[0].mxu0 %v936
      %v996 = vpop.f32.mrb[0].mxu0
      %v997 = vadd.f32 0.0, %v996
      %v998 = vpop.f32.mrb[0].mxu0
      %v999 = vpop.f32.mrb[0].mxu0
      %v1000 = vadd.f32 0.0, %v999
      %v1001 = vpop.f32.mrb[0].mxu0
      %1002 = vdwg.mxu0
      %v1003 = vadd.f32 %v769, %v973
      %v1004 = vadd.f32 %v770, %v976
      %v1005 = vadd.f32 %v771, %v981
      %v1006 = vadd.f32 %v772, %v984
      %v1007 = vadd.f32 %v773, %v989
      %v1008 = vadd.f32 %v774, %v992
      %v1009 = vadd.f32 %v775, %v997
      %v1010 = vadd.f32 %v776, %v1000
      %vm1011 = vcmask 261120
      %1012 = vst.msk [vmem:[%s305] sm:$0xff] %vm1011, %v1003
      %1013 = vst.msk [vmem:[%s305 + $0x8] sm:$0xff] %vm1011, %v1004
      %1014 = vst.msk [vmem:[%s305 + $0x10] sm:$0xff] %vm1011, %v1005
      %1015 = vst.msk [vmem:[%s305 + $0x18] sm:$0xff] %vm1011, %v1006
      %1016 = vst.msk [vmem:[%s305 + $0x20] sm:$0xff] %vm1011, %v1007
      %1017 = vst.msk [vmem:[%s305 + $0x28] sm:$0xff] %vm1011, %v1008
      %1018 = vst.msk [vmem:[%s305 + $0x30] sm:$0xff] %vm1011, %v1009
      %1019 = vst.msk [vmem:[%s305 + $0x38] sm:$0xff] %vm1011, %v1010
      %p1020 = scmp.eq.s32.totalorder %s23, 0
      // Predicated region
      $region29: #{unet_up_forward.3} parent=27 // pred_check
        %p1021 = pneg %p1020
      $region30: #{unet_up_forward.3} parent=27 // pred_check_branch
        %1023 = sbr.rel (%p1021) target = $region32
      $region31: #{unet_up_forward.3} parent=27 // pred_region
        %vm1024 = vcmask 253952
        %1025 = vst.msk [vmem:[%s311] sm:$0x1] %vm1024, 0.0
        %1026 = vst.msk [vmem:[%s317] sm:$0x1] %vm1024, 0.0
      $region32: #{unet_up_forward.3} parent=27 // pred_fallthru
        _
      %v1027 = vld [vmem:[%s311] sm:$0x1]
      %v1028 = vsel %vm1011, %v1003, 0.0
      %v1029 = vsel %vm1011, %v1004, 0.0
      %v1030 = vadd.f32 %v1028, %v1029
      %v1031 = vsel %vm1011, %v1005, 0.0
      %v1032 = vadd.f32 %v1030, %v1031
      %v1033 = vsel %vm1011, %v1006, 0.0
      %v1034 = vadd.f32 %v1032, %v1033
      %v1035 = vsel %vm1011, %v1007, 0.0
      %v1036 = vadd.f32 %v1034, %v1035
      %v1037 = vsel %vm1011, %v1008, 0.0
      %v1038 = vadd.f32 %v1036, %v1037
      %v1039 = vsel %vm1011, %v1009, 0.0
      %v1040 = vadd.f32 %v1038, %v1039
      %v1041 = vsel %vm1011, %v1010, 0.0
      %v1042 = vadd.f32 %v1040, %v1041
      %v1043 = vrot.slane %v1042, 4
      %v1044 = vadd.f32 %v1042, %v1043
      %v1045 = vrot.slane %v1044, 2
      %v1046 = vadd.f32 %v1044, %v1045
      %v1047 = vrot.slane %v1046, 1
      %v1048 = vadd.f32 %v1046, %v1047
      %v1049 = vadd.f32 %v1027, %v1048
      %vm1050 = vcmask 253952
      %1051 = vst.msk [vmem:[%s311] sm:$0x1] %vm1050, %v1049
      %v1052 = vld [vmem:[%s317] sm:$0x1]
      %v1053 = vmul.f32 %v1003, %v1003
      %v1054 = vmul.f32 %v1004, %v1004
      %v1055 = vmul.f32 %v1005, %v1005
      %v1056 = vmul.f32 %v1006, %v1006
      %v1057 = vmul.f32 %v1007, %v1007
      %v1058 = vmul.f32 %v1008, %v1008
      %v1059 = vmul.f32 %v1009, %v1009
      %v1060 = vmul.f32 %v1010, %v1010
      %v1061 = vsel %vm1011, %v1053, 0.0
      %v1062 = vsel %vm1011, %v1054, 0.0
      %v1063 = vadd.f32 %v1061, %v1062
      %v1064 = vsel %vm1011, %v1055, 0.0
      %v1065 = vadd.f32 %v1063, %v1064
      %v1066 = vsel %vm1011, %v1056, 0.0
      %v1067 = vadd.f32 %v1065, %v1066
      %v1068 = vsel %vm1011, %v1057, 0.0
      %v1069 = vadd.f32 %v1067, %v1068
      %v1070 = vsel %vm1011, %v1058, 0.0
      %v1071 = vadd.f32 %v1069, %v1070
      %v1072 = vsel %vm1011, %v1059, 0.0
      %v1073 = vadd.f32 %v1071, %v1072
      %v1074 = vsel %vm1011, %v1060, 0.0
      %v1075 = vadd.f32 %v1073, %v1074
      %v1076 = vrot.slane %v1075, 4
      %v1077 = vadd.f32 %v1075, %v1076
      %v1078 = vrot.slane %v1077, 2
      %v1079 = vadd.f32 %v1077, %v1078
      %v1080 = vrot.slane %v1079, 1
      %v1081 = vadd.f32 %v1079, %v1080
      %v1082 = vadd.f32 %v1052, %v1081
      %1083 = vst.msk [vmem:[%s317] sm:$0x1] %vm1050, %v1082
      %p1084 = scmp.lt.s32.totalorder %s21, 1
      %s1085 = scalar_select %p1084, %s21, 1
      %p1086 = scmp.lt.s32.totalorder %s23, 3
      %s1087 = scalar_select %p1086, %s23, 3
      %p1088 = scmp.lt.s32.totalorder %s22, 0
      %s1089 = scalar_select %p1088, %s22, 0
      %s1090 = smul.addr %s1087, 8
      %s1091 = sadd.s32 %s1089, %s1090
      %s1092 = smul.addr %s1085, 32
      %s1093 = sadd.s32 %s1091, %s1092
      %s1094 = smul.addr %s1093, 8
      %s1095 = scalar_lea.vmem %s2, %s1094
      %p1096 = scmp.lt.s32.totalorder %s21, 1
      %s1097 = scalar_select %p1096, %s21, 1
      %p1098 = scmp.lt.s32.totalorder %s22, 0
      %s1099 = scalar_select %p1098, %s22, 0
      %s1100 = sadd.s32 %s1099, %s1097
      %s1101 = scalar_lea.vmem %s3, %s1100
      %p1102 = scmp.lt.s32.totalorder %s21, 1
      %s1103 = scalar_select %p1102, %s21, 1
      %p1104 = scmp.lt.s32.totalorder %s22, 0
      %s1105 = scalar_select %p1104, %s22, 0
      %s1106 = sadd.s32 %s1105, %s1103
      %s1107 = scalar_lea.vmem %s4, %s1106
      // Predicated region
      $region33: #{unet_up_forward.3} parent=27 // pred_check
        %p1108 = pneg %p115
      $region34: #{unet_up_forward.3} parent=27 // pred_check_branch
        %1110 = sbr.rel (%p1108) target = $region36
      $region35: #{unet_up_forward.3} parent=27 // pred_region
        _
      $region36: #{unet_up_forward.3} parent=27 // pred_fallthru
        _
      // Predicated region
      $region37: #{unet_up_forward.3} parent=27 // pred_check
        %p1111 = pneg %p143
      $region38: #{unet_up_forward.3} parent=27 // pred_check_branch
        %1113 = sbr.rel (%p1111) target = $region40
      $region39: #{unet_up_forward.3} parent=27 // pred_region
        _
      $region40: #{unet_up_forward.3} parent=27 // pred_fallthru
        _
      // Predicated region
      $region41: #{unet_up_forward.3} parent=27 // pred_check
        %p1114 = pneg %p171
      $region42: #{unet_up_forward.3} parent=27 // pred_check_branch
        %1116 = sbr.rel (%p1114) target = $region44
      $region43: #{unet_up_forward.3} parent=27 // pred_region
        _
      $region44: #{unet_up_forward.3} parent=27 // pred_fallthru
        _
    $region28: #{unet_up_forward.3} parent=5 // pred_fallthru
      _
    %p1117 = scmp.le.s32.totalorder 2, %s11
    // Predicated region
    $region45: #{unet_up_forward.3} parent=5 // pred_check
      %p1118 = pneg %p1117
    $region46: #{unet_up_forward.3} parent=5 // pred_check_branch
      %1120 = sbr.rel (%p1118) target = $region48
    $region47: #{unet_up_forward.3} parent=5 // pred_region
      %s1121 = ssub.s32 %s11, 2
      // Predicated region
      $region49: #{unet_up_forward.3} parent=47 // pred_check
        %p1122 = pneg %p121
      $region50: #{unet_up_forward.3} parent=47 // pred_check_branch
        %1124 = sbr.rel (%p1122) target = $region52
      $region51: #{unet_up_forward.3} parent=47 // pred_region
        %p1125 = scmp.lt.s32.totalorder %s24, 1
        %s1126 = scalar_select %p1125, %s24, 1
        %p1127 = scmp.lt.s32.totalorder %s26, 3
        %s1128 = scalar_select %p1127, %s26, 3
        %p1129 = scmp.lt.s32.totalorder %s25, 0
        %s1130 = scalar_select %p1129, %s25, 0
        %s1131 = smul.addr %s1128, 8
        %s1132 = sadd.s32 %s1130, %s1131
        %s1133 = smul.addr %s1126, 32
        %s1134 = sadd.s32 %s1132, %s1133
        %s1135 = smul.addr %s1134, 8
        %s1136 = scalar_lea.vmem %s2, %s1135
      $region52: #{unet_up_forward.3} parent=47 // pred_fallthru
        _
      // Predicated region
      $region53: #{unet_up_forward.3} parent=47 // pred_check
        %p1137 = pneg %p149
      $region54: #{unet_up_forward.3} parent=47 // pred_check_branch
        %1139 = sbr.rel (%p1137) target = $region56
      $region55: #{unet_up_forward.3} parent=47 // pred_region
        %p1140 = scmp.lt.s32.totalorder %s24, 1
        %s1141 = scalar_select %p1140, %s24, 1
        %p1142 = scmp.lt.s32.totalorder %s25, 0
        %s1143 = scalar_select %p1142, %s25, 0
        %s1144 = sadd.s32 %s1143, %s1141
        %s1145 = scalar_lea.vmem %s3, %s1144
      $region56: #{unet_up_forward.3} parent=47 // pred_fallthru
        _
      // Predicated region
      $region57: #{unet_up_forward.3} parent=47 // pred_check
        %p1146 = pneg %p177
      $region58: #{unet_up_forward.3} parent=47 // pred_check_branch
        %1148 = sbr.rel (%p1146) target = $region60
      $region59: #{unet_up_forward.3} parent=47 // pred_region
        %p1149 = scmp.lt.s32.totalorder %s24, 1
        %s1150 = scalar_select %p1149, %s24, 1
        %p1151 = scmp.lt.s32.totalorder %s25, 0
        %s1152 = scalar_select %p1151, %s25, 0
        %s1153 = sadd.s32 %s1152, %s1150
        %s1154 = scalar_lea.vmem %s4, %s1153
      $region60: #{unet_up_forward.3} parent=47 // pred_fallthru
        _
    $region48: #{unet_up_forward.3} parent=5 // pred_fallthru
      _
  $region6: #{unet_up_forward.3} parent=0 // loop_footer
    %s15 = sadd.s32 1, %s11
  $region7: #{unet_up_forward.3} parent=0 // loop_footer_branch
    %10 = sbr.rel target = $region3
  $region8: #{unet_up_forward.3} parent=0 // loop_exit
    _

</llo_original>
